<compile_context>
chip_gen: v7x
topology: tpu7x:2x2x1
jax: 0.10.0
libtpu: 0.0.40
codegen_flags: <defaults>
</compile_context>

<pallas_src>
import jax
import jax.numpy as jnp
from jax.experimental import pallas as pl
from jax.experimental.pallas import tpu as pltpu

# ---- static problem sizes (FC layer 6*22*7 forces H=46, W=17 input) ----
N = 2
CIN, COUT = 3, 6
H, W = 46, 17
KH, KW = 3, 4
KFEAT = CIN * KH * KW                    # 36
HOUT, WOUT = H - KH + 1, W - KW + 1      # 44, 14
HP, WP = HOUT // 2, WOUT // 2            # 22, 7
PP = HP * WP                             # 154 pooled positions per sample
NQ = 4                                   # 2x2 pool quadrants
FC_IN = COUT * PP                        # 924
FC_OUT = 5
BN_EPS = 1e-5


# ---------------- fused Pallas kernel ----------------
def _cnn_fused_kernel(p_ref, w0_ref, g_ref, beta_ref, w1_ref, b1_ref, o_ref):
    # p_ref  : [NQ*N, 36, 154] bf16  im2col patches, leading idx = q*N + n,
    #                                lanes ordered (hp, wp)
    # w0_ref : [6, 36]  bf16         conv weight (flattened (ci,kh,kw))
    # g_ref  : [6, 1]   f32          BN gamma
    # beta_ref:[6, 1]   f32          BN beta
    # w1_ref : [6, 154, 5] f32       FC weight regrouped per conv channel
    # b1_ref : [1, 5]   f32          FC bias
    # o_ref  : [N, 5]   f32          final output

    w0 = w0_ref[...]

    # --- Conv2d as im2col matmuls, lane-dense [COUT, PP] per (quadrant, sample)
    zs = [[None] * N for _ in range(NQ)]
    s = jnp.zeros((COUT, 1), jnp.float32)
    s2 = jnp.zeros((COUT, 1), jnp.float32)
    for q in range(NQ):
        for n in range(N):
            z = jnp.dot(w0, p_ref[q * N + n],
                        preferred_element_type=jnp.float32)      # [6, 154] f32
            zs[q][n] = z
            s = s + jnp.sum(z, axis=-1, keepdims=True)
            s2 = s2 + jnp.sum(z * z, axis=-1, keepdims=True)

    # --- BatchNorm2d (training-mode batch stats over all N*HOUT*WOUT positions,
    #     biased variance), folded into a single per-channel scale/shift.
    #     Conv bias is omitted: it is exactly cancelled by the mean subtraction.
    cnt = float(NQ * N * PP)                                      # 1232
    mean = s * (1.0 / cnt)
    var = s2 * (1.0 / cnt) - mean * mean
    scale = g_ref[...] * jax.lax.rsqrt(var + BN_EPS)              # [6, 1]
    shift = beta_ref[...] - mean * scale                          # [6, 1]

    for n in range(N):
        # --- BN + ReLU, then MaxPool2d(2,2) = elementwise max over 4 quadrants
        pooled = None
        for q in range(NQ):
            y = jnp.maximum(zs[q][n] * scale + shift, 0.0)        # [6, 154]
            pooled = y if pooled is None else jnp.maximum(pooled, y)
        # --- Linear(924 -> 5): contract (channel, pooled-position) against the
        #     per-channel weight slabs; accumulate in f32 on the MXU.
        acc = jnp.zeros((1, FC_OUT), jnp.float32)
        for c in range(COUT):
            acc = acc + jnp.dot(pooled[c:c + 1, :], w1_ref[c],
                                preferred_element_type=jnp.float32)
        fc = jnp.maximum(acc + b1_ref[...], 0.0)                  # ReLU
        o_ref[n:n + 1, :] = jax.nn.sigmoid(fc)                    # Sigmoid


def _full_spec(shape):
    zeros = (0,) * len(shape)
    return pl.BlockSpec(shape, lambda i, zeros=zeros: zeros)


def cnn_fused(patches, w0m, gamma2, beta2, w1r, b1r):
    return pl.pallas_call(
        _cnn_fused_kernel,
        out_shape=jax.ShapeDtypeStruct((N, FC_OUT), jnp.float32),
        grid=(1,),
        in_specs=[_full_spec(patches.shape), _full_spec(w0m.shape),
                  _full_spec(gamma2.shape), _full_spec(beta2.shape),
                  _full_spec(w1r.shape), _full_spec(b1r.shape)],
        out_specs=_full_spec((N, FC_OUT)),
        compiler_params=pltpu.CompilerParams(
            dimension_semantics=("arbitrary",)),
    )(patches, w0m, gamma2, beta2, w1r, b1r)


# ---------------- one-time parameter preprocessing (hoisted out of forward) ----
def prepare_params(params):
    w0, b0, gamma, beta, w1, b1 = params
    del b0  # conv bias is mathematically cancelled by BN's mean subtraction
    w0m = w0.reshape(COUT, KFEAT).astype(jnp.bfloat16)            # [6, 36]
    gamma2 = gamma.reshape(COUT, 1).astype(jnp.float32)           # [6, 1]
    beta2 = beta.reshape(COUT, 1).astype(jnp.float32)             # [6, 1]
    # w1 is [5, 924] with flatten order (c, hp, wp); regroup per conv channel
    w1r = w1.reshape(FC_OUT, COUT, PP).transpose(1, 2, 0)         # [6, 154, 5]
    b1r = b1.reshape(1, FC_OUT)                                   # [1, 5]
    return (w0m, gamma2, beta2, w1r, b1r)


# ---------------- forward (minimal XLA glue: im2col + regroup) ----------------
def cnn_forward(x, prep):
    w0m, gamma2, beta2, w1r, b1r = prep
    n = x.shape[0]
    xb = x.astype(jnp.bfloat16)
    # im2col: [N, 36, 44, 14]; feature order (ci, kh, kw) matches w0 flatten
    pat = jax.lax.conv_general_dilated_patches(
        xb, filter_shape=(KH, KW), window_strides=(1, 1), padding='VALID',
        dimension_numbers=('NCHW', 'OIHW', 'NCHW'))
    # regroup conv-output positions as (dh, dw, n, feat, hp, wp) so each pool
    # quadrant / sample is a contiguous [36, 154] slab for the kernel
    pat = pat.reshape(n, KFEAT, HP, 2, WP, 2)        # (n, f, hp, dh, wp, dw)
    pat = pat.transpose(3, 5, 0, 1, 2, 4)            # (dh, dw, n, f, hp, wp)
    pat = pat.reshape(NQ * n, KFEAT, PP)             # [8, 36, 154]
    return cnn_fused(pat, w0m, gamma2, beta2, w1r, b1r)


# ---------------- pure-JAX reference (for a correctness self-check) ----------
def cnn_reference(x, params):
    w0, b0, gamma, beta, w1, b1 = params
    conv = jax.lax.conv_general_dilated(
        x, w0, (1, 1), 'VALID',
        dimension_numbers=('NCHW', 'OIHW', 'NCHW')) + b0.reshape(1, COUT, 1, 1)
    mean = conv.mean(axis=(0, 2, 3), keepdims=True)
    var = conv.var(axis=(0, 2, 3), keepdims=True)    # biased, as in BN training
    y = (conv - mean) * jax.lax.rsqrt(var + BN_EPS)
    y = y * gamma.reshape(1, COUT, 1, 1) + beta.reshape(1, COUT, 1, 1)
    y = jnp.maximum(y, 0.0)
    pooled = y.reshape(x.shape[0], COUT, HP, 2, WP, 2).max(axis=(3, 5))
    flat = pooled.reshape(x.shape[0], FC_IN)
    fc = jnp.maximum(flat @ w1.T + b1, 0.0)
    return jax.nn.sigmoid(fc)


# ---------------- deterministic parameters & example run ----------------
def init_params(key):
    k0, k1, k2, k3 = jax.random.split(key, 4)
    w0 = jax.random.normal(k0, (COUT, CIN, KH, KW), jnp.float32) * 0.1
    b0 = jax.random.normal(k1, (COUT,), jnp.float32) * 0.1
    gamma = jnp.ones((COUT,), jnp.float32)
    beta = jnp.zeros((COUT,), jnp.float32)
    w1 = jax.random.normal(k2, (FC_OUT, FC_IN), jnp.float32) * 0.05
    b1 = jax.random.normal(k3, (FC_OUT,), jnp.float32) * 0.05
    return (w0, b0, gamma, beta, w1, b1)


if __name__ == "__main__":
    key = jax.random.PRNGKey(0)
    pkey, xkey = jax.random.split(key)
    params = init_params(pkey)
    prep = prepare_params(params)      # done once, outside the per-call graph
    x = jax.random.normal(xkey, (N, CIN, H, W), jnp.float32)

    out = jax.block_until_ready(jax.jit(cnn_forward)(x, prep))
    assert out.shape == (N, FC_OUT) and out.dtype == jnp.float32
    assert bool(jnp.all(jnp.isfinite(out)))

    # loose tolerance: kernel uses bf16 conv-matmul inputs (f32 accumulation)
    ref = cnn_reference(x, params)
    assert bool(jnp.all(jnp.abs(out - ref) < 2e-2))

    print("KERNEL_OK")
</pallas_src>

<mosaic_0001>
module attributes {stable_mosaic.version = 11 : i64} {
  func.func @_cnn_fused_kernel(%arg0: i32, %arg1: memref<8x36x154xbf16, #tpu.memory_space<vmem>>, %arg2: memref<6x36xbf16, #tpu.memory_space<vmem>>, %arg3: memref<6x1xf32, #tpu.memory_space<vmem>>, %arg4: memref<6x1xf32, #tpu.memory_space<vmem>>, %arg5: memref<6x154x5xf32, #tpu.memory_space<vmem>>, %arg6: memref<1x5xf32, #tpu.memory_space<vmem>>, %arg7: memref<2x5xf32, #tpu.memory_space<vmem>>) attributes {dimension_semantics = [#tpu.dimension_semantics<arbitrary>], iteration_bounds = array<i64: 1>, scalar_prefetch = 0 : i64, scratch_operands = 0 : i64, tpu.core_type = #tpu.core_type<tc>, window_params = [{pipeline_mode = #tpu.pipeline_mode<synchronous>, transform_indices = @transform_0, window_bounds = array<i64: 8, 36, 154>}, {pipeline_mode = #tpu.pipeline_mode<synchronous>, transform_indices = @transform_1, window_bounds = array<i64: 6, 36>}, {pipeline_mode = #tpu.pipeline_mode<synchronous>, transform_indices = @transform_2, window_bounds = array<i64: 6, 1>}, {pipeline_mode = #tpu.pipeline_mode<synchronous>, transform_indices = @transform_3, window_bounds = array<i64: 6, 1>}, {pipeline_mode = #tpu.pipeline_mode<synchronous>, transform_indices = @transform_4, window_bounds = array<i64: 6, 154, 5>}, {pipeline_mode = #tpu.pipeline_mode<synchronous>, transform_indices = @transform_5, window_bounds = array<i64: 1, 5>}, {pipeline_mode = #tpu.pipeline_mode<synchronous>, transform_indices = @transform_6, window_bounds = array<i64: 2, 5>}]} {
    %c0 = arith.constant 0 : index
    %c0_0 = arith.constant 0 : index
    %0 = vector.load %arg2[%c0, %c0_0] : memref<6x36xbf16, #tpu.memory_space<vmem>>, vector<6x36xbf16>
    %cst = arith.constant 0.000000e+00 : f32
    %1 = vector.broadcast %cst : f32 to vector<6x1xf32>
    %cst_1 = arith.constant 0.000000e+00 : f32
    %2 = vector.broadcast %cst_1 : f32 to vector<6x1xf32>
    %c0_2 = arith.constant 0 : index
    %c0_3 = arith.constant 0 : index
    %c0_4 = arith.constant 0 : index
    %3 = vector.load %arg1[%c0_2, %c0_3, %c0_4] : memref<8x36x154xbf16, #tpu.memory_space<vmem>>, vector<1x36x154xbf16>
    %4 = vector.shape_cast %3 : vector<1x36x154xbf16> to vector<36x154xbf16>
    %cst_5 = arith.constant dense<0.000000e+00> : vector<6x154xf32>
    %5 = tpu.matmul %0, %4, %cst_5 {dimension_numbers = #tpu.dot_dimension_numbers<[1], [0], [0], [1], [0, 0, 1, 1], [], []>} : vector<6x36xbf16>, vector<36x154xbf16>, vector<6x154xf32> -> vector<6x154xf32>
    %cst_6 = arith.constant dense<0.000000e+00> : vector<6xf32>
    %6 = vector.multi_reduction <add>, %5, %cst_6 [1] : vector<6x154xf32> to vector<6xf32>
    %7 = vector.shape_cast %6 : vector<6xf32> to vector<6x1xf32>
    %8 = arith.addf %1, %7 : vector<6x1xf32>
    %9 = arith.mulf %5, %5 : vector<6x154xf32>
    %cst_7 = arith.constant dense<0.000000e+00> : vector<6xf32>
    %10 = vector.multi_reduction <add>, %9, %cst_7 [1] : vector<6x154xf32> to vector<6xf32>
    %11 = vector.shape_cast %10 : vector<6xf32> to vector<6x1xf32>
    %12 = arith.addf %2, %11 : vector<6x1xf32>
    %c1 = arith.constant 1 : index
    %c0_8 = arith.constant 0 : index
    %c0_9 = arith.constant 0 : index
    %13 = vector.load %arg1[%c1, %c0_8, %c0_9] : memref<8x36x154xbf16, #tpu.memory_space<vmem>>, vector<1x36x154xbf16>
    %14 = vector.shape_cast %13 : vector<1x36x154xbf16> to vector<36x154xbf16>
    %cst_10 = arith.constant dense<0.000000e+00> : vector<6x154xf32>
    %15 = tpu.matmul %0, %14, %cst_10 {dimension_numbers = #tpu.dot_dimension_numbers<[1], [0], [0], [1], [0, 0, 1, 1], [], []>} : vector<6x36xbf16>, vector<36x154xbf16>, vector<6x154xf32> -> vector<6x154xf32>
    %cst_11 = arith.constant dense<0.000000e+00> : vector<6xf32>
    %16 = vector.multi_reduction <add>, %15, %cst_11 [1] : vector<6x154xf32> to vector<6xf32>
    %17 = vector.shape_cast %16 : vector<6xf32> to vector<6x1xf32>
    %18 = arith.addf %8, %17 : vector<6x1xf32>
    %19 = arith.mulf %15, %15 : vector<6x154xf32>
    %cst_12 = arith.constant dense<0.000000e+00> : vector<6xf32>
    %20 = vector.multi_reduction <add>, %19, %cst_12 [1] : vector<6x154xf32> to vector<6xf32>
    %21 = vector.shape_cast %20 : vector<6xf32> to vector<6x1xf32>
    %22 = arith.addf %12, %21 : vector<6x1xf32>
    %c2 = arith.constant 2 : index
    %c0_13 = arith.constant 0 : index
    %c0_14 = arith.constant 0 : index
    %23 = vector.load %arg1[%c2, %c0_13, %c0_14] : memref<8x36x154xbf16, #tpu.memory_space<vmem>>, vector<1x36x154xbf16>
    %24 = vector.shape_cast %23 : vector<1x36x154xbf16> to vector<36x154xbf16>
    %cst_15 = arith.constant dense<0.000000e+00> : vector<6x154xf32>
    %25 = tpu.matmul %0, %24, %cst_15 {dimension_numbers = #tpu.dot_dimension_numbers<[1], [0], [0], [1], [0, 0, 1, 1], [], []>} : vector<6x36xbf16>, vector<36x154xbf16>, vector<6x154xf32> -> vector<6x154xf32>
    %cst_16 = arith.constant dense<0.000000e+00> : vector<6xf32>
    %26 = vector.multi_reduction <add>, %25, %cst_16 [1] : vector<6x154xf32> to vector<6xf32>
    %27 = vector.shape_cast %26 : vector<6xf32> to vector<6x1xf32>
    %28 = arith.addf %18, %27 : vector<6x1xf32>
    %29 = arith.mulf %25, %25 : vector<6x154xf32>
    %cst_17 = arith.constant dense<0.000000e+00> : vector<6xf32>
    %30 = vector.multi_reduction <add>, %29, %cst_17 [1] : vector<6x154xf32> to vector<6xf32>
    %31 = vector.shape_cast %30 : vector<6xf32> to vector<6x1xf32>
    %32 = arith.addf %22, %31 : vector<6x1xf32>
    %c3 = arith.constant 3 : index
    %c0_18 = arith.constant 0 : index
    %c0_19 = arith.constant 0 : index
    %33 = vector.load %arg1[%c3, %c0_18, %c0_19] : memref<8x36x154xbf16, #tpu.memory_space<vmem>>, vector<1x36x154xbf16>
    %34 = vector.shape_cast %33 : vector<1x36x154xbf16> to vector<36x154xbf16>
    %cst_20 = arith.constant dense<0.000000e+00> : vector<6x154xf32>
    %35 = tpu.matmul %0, %34, %cst_20 {dimension_numbers = #tpu.dot_dimension_numbers<[1], [0], [0], [1], [0, 0, 1, 1], [], []>} : vector<6x36xbf16>, vector<36x154xbf16>, vector<6x154xf32> -> vector<6x154xf32>
    %cst_21 = arith.constant dense<0.000000e+00> : vector<6xf32>
    %36 = vector.multi_reduction <add>, %35, %cst_21 [1] : vector<6x154xf32> to vector<6xf32>
    %37 = vector.shape_cast %36 : vector<6xf32> to vector<6x1xf32>
    %38 = arith.addf %28, %37 : vector<6x1xf32>
    %39 = arith.mulf %35, %35 : vector<6x154xf32>
    %cst_22 = arith.constant dense<0.000000e+00> : vector<6xf32>
    %40 = vector.multi_reduction <add>, %39, %cst_22 [1] : vector<6x154xf32> to vector<6xf32>
    %41 = vector.shape_cast %40 : vector<6xf32> to vector<6x1xf32>
    %42 = arith.addf %32, %41 : vector<6x1xf32>
    %c4 = arith.constant 4 : index
    %c0_23 = arith.constant 0 : index
    %c0_24 = arith.constant 0 : index
    %43 = vector.load %arg1[%c4, %c0_23, %c0_24] : memref<8x36x154xbf16, #tpu.memory_space<vmem>>, vector<1x36x154xbf16>
    %44 = vector.shape_cast %43 : vector<1x36x154xbf16> to vector<36x154xbf16>
    %cst_25 = arith.constant dense<0.000000e+00> : vector<6x154xf32>
    %45 = tpu.matmul %0, %44, %cst_25 {dimension_numbers = #tpu.dot_dimension_numbers<[1], [0], [0], [1], [0, 0, 1, 1], [], []>} : vector<6x36xbf16>, vector<36x154xbf16>, vector<6x154xf32> -> vector<6x154xf32>
    %cst_26 = arith.constant dense<0.000000e+00> : vector<6xf32>
    %46 = vector.multi_reduction <add>, %45, %cst_26 [1] : vector<6x154xf32> to vector<6xf32>
    %47 = vector.shape_cast %46 : vector<6xf32> to vector<6x1xf32>
    %48 = arith.addf %38, %47 : vector<6x1xf32>
    %49 = arith.mulf %45, %45 : vector<6x154xf32>
    %cst_27 = arith.constant dense<0.000000e+00> : vector<6xf32>
    %50 = vector.multi_reduction <add>, %49, %cst_27 [1] : vector<6x154xf32> to vector<6xf32>
    %51 = vector.shape_cast %50 : vector<6xf32> to vector<6x1xf32>
    %52 = arith.addf %42, %51 : vector<6x1xf32>
    %c5 = arith.constant 5 : index
    %c0_28 = arith.constant 0 : index
    %c0_29 = arith.constant 0 : index
    %53 = vector.load %arg1[%c5, %c0_28, %c0_29] : memref<8x36x154xbf16, #tpu.memory_space<vmem>>, vector<1x36x154xbf16>
    %54 = vector.shape_cast %53 : vector<1x36x154xbf16> to vector<36x154xbf16>
    %cst_30 = arith.constant dense<0.000000e+00> : vector<6x154xf32>
    %55 = tpu.matmul %0, %54, %cst_30 {dimension_numbers = #tpu.dot_dimension_numbers<[1], [0], [0], [1], [0, 0, 1, 1], [], []>} : vector<6x36xbf16>, vector<36x154xbf16>, vector<6x154xf32> -> vector<6x154xf32>
    %cst_31 = arith.constant dense<0.000000e+00> : vector<6xf32>
    %56 = vector.multi_reduction <add>, %55, %cst_31 [1] : vector<6x154xf32> to vector<6xf32>
    %57 = vector.shape_cast %56 : vector<6xf32> to vector<6x1xf32>
    %58 = arith.addf %48, %57 : vector<6x1xf32>
    %59 = arith.mulf %55, %55 : vector<6x154xf32>
    %cst_32 = arith.constant dense<0.000000e+00> : vector<6xf32>
    %60 = vector.multi_reduction <add>, %59, %cst_32 [1] : vector<6x154xf32> to vector<6xf32>
    %61 = vector.shape_cast %60 : vector<6xf32> to vector<6x1xf32>
    %62 = arith.addf %52, %61 : vector<6x1xf32>
    %c6 = arith.constant 6 : index
    %c0_33 = arith.constant 0 : index
    %c0_34 = arith.constant 0 : index
    %63 = vector.load %arg1[%c6, %c0_33, %c0_34] : memref<8x36x154xbf16, #tpu.memory_space<vmem>>, vector<1x36x154xbf16>
    %64 = vector.shape_cast %63 : vector<1x36x154xbf16> to vector<36x154xbf16>
    %cst_35 = arith.constant dense<0.000000e+00> : vector<6x154xf32>
    %65 = tpu.matmul %0, %64, %cst_35 {dimension_numbers = #tpu.dot_dimension_numbers<[1], [0], [0], [1], [0, 0, 1, 1], [], []>} : vector<6x36xbf16>, vector<36x154xbf16>, vector<6x154xf32> -> vector<6x154xf32>
    %cst_36 = arith.constant dense<0.000000e+00> : vector<6xf32>
    %66 = vector.multi_reduction <add>, %65, %cst_36 [1] : vector<6x154xf32> to vector<6xf32>
    %67 = vector.shape_cast %66 : vector<6xf32> to vector<6x1xf32>
    %68 = arith.addf %58, %67 : vector<6x1xf32>
    %69 = arith.mulf %65, %65 : vector<6x154xf32>
    %cst_37 = arith.constant dense<0.000000e+00> : vector<6xf32>
    %70 = vector.multi_reduction <add>, %69, %cst_37 [1] : vector<6x154xf32> to vector<6xf32>
    %71 = vector.shape_cast %70 : vector<6xf32> to vector<6x1xf32>
    %72 = arith.addf %62, %71 : vector<6x1xf32>
    %c7 = arith.constant 7 : index
    %c0_38 = arith.constant 0 : index
    %c0_39 = arith.constant 0 : index
    %73 = vector.load %arg1[%c7, %c0_38, %c0_39] : memref<8x36x154xbf16, #tpu.memory_space<vmem>>, vector<1x36x154xbf16>
    %74 = vector.shape_cast %73 : vector<1x36x154xbf16> to vector<36x154xbf16>
    %cst_40 = arith.constant dense<0.000000e+00> : vector<6x154xf32>
    %75 = tpu.matmul %0, %74, %cst_40 {dimension_numbers = #tpu.dot_dimension_numbers<[1], [0], [0], [1], [0, 0, 1, 1], [], []>} : vector<6x36xbf16>, vector<36x154xbf16>, vector<6x154xf32> -> vector<6x154xf32>
    %cst_41 = arith.constant dense<0.000000e+00> : vector<6xf32>
    %76 = vector.multi_reduction <add>, %75, %cst_41 [1] : vector<6x154xf32> to vector<6xf32>
    %77 = vector.shape_cast %76 : vector<6xf32> to vector<6x1xf32>
    %78 = arith.addf %68, %77 : vector<6x1xf32>
    %79 = arith.mulf %75, %75 : vector<6x154xf32>
    %cst_42 = arith.constant dense<0.000000e+00> : vector<6xf32>
    %80 = vector.multi_reduction <add>, %79, %cst_42 [1] : vector<6x154xf32> to vector<6xf32>
    %81 = vector.shape_cast %80 : vector<6xf32> to vector<6x1xf32>
    %82 = arith.addf %72, %81 : vector<6x1xf32>
    %cst_43 = arith.constant 8.11688311E-4 : f32
    %83 = vector.broadcast %cst_43 : f32 to vector<6x1xf32>
    %84 = arith.mulf %78, %83 : vector<6x1xf32>
    %cst_44 = arith.constant 8.11688311E-4 : f32
    %85 = vector.broadcast %cst_44 : f32 to vector<6x1xf32>
    %86 = arith.mulf %82, %85 : vector<6x1xf32>
    %87 = arith.mulf %84, %84 : vector<6x1xf32>
    %88 = arith.subf %86, %87 : vector<6x1xf32>
    %c0_45 = arith.constant 0 : index
    %c0_46 = arith.constant 0 : index
    %89 = vector.load %arg3[%c0_45, %c0_46] : memref<6x1xf32, #tpu.memory_space<vmem>>, vector<6x1xf32>
    %cst_47 = arith.constant 9.99999974E-6 : f32
    %90 = vector.broadcast %cst_47 : f32 to vector<6x1xf32>
    %91 = arith.addf %88, %90 : vector<6x1xf32>
    %92 = math.rsqrt %91 : vector<6x1xf32>
    %93 = arith.mulf %89, %92 : vector<6x1xf32>
    %c0_48 = arith.constant 0 : index
    %c0_49 = arith.constant 0 : index
    %94 = vector.load %arg4[%c0_48, %c0_49] : memref<6x1xf32, #tpu.memory_space<vmem>>, vector<6x1xf32>
    %95 = arith.mulf %84, %93 : vector<6x1xf32>
    %96 = arith.subf %94, %95 : vector<6x1xf32>
    %97 = vector.broadcast %93 : vector<6x1xf32> to vector<6x154xf32>
    %98 = arith.mulf %5, %97 : vector<6x154xf32>
    %99 = vector.broadcast %96 : vector<6x1xf32> to vector<6x154xf32>
    %100 = arith.addf %98, %99 : vector<6x154xf32>
    %cst_50 = arith.constant 0.000000e+00 : f32
    %101 = vector.broadcast %cst_50 : f32 to vector<6x154xf32>
    %102 = arith.maximumf %100, %101 : vector<6x154xf32>
    %103 = vector.broadcast %93 : vector<6x1xf32> to vector<6x154xf32>
    %104 = arith.mulf %25, %103 : vector<6x154xf32>
    %105 = vector.broadcast %96 : vector<6x1xf32> to vector<6x154xf32>
    %106 = arith.addf %104, %105 : vector<6x154xf32>
    %cst_51 = arith.constant 0.000000e+00 : f32
    %107 = vector.broadcast %cst_51 : f32 to vector<6x154xf32>
    %108 = arith.maximumf %106, %107 : vector<6x154xf32>
    %109 = arith.maximumf %102, %108 : vector<6x154xf32>
    %110 = vector.broadcast %93 : vector<6x1xf32> to vector<6x154xf32>
    %111 = arith.mulf %45, %110 : vector<6x154xf32>
    %112 = vector.broadcast %96 : vector<6x1xf32> to vector<6x154xf32>
    %113 = arith.addf %111, %112 : vector<6x154xf32>
    %cst_52 = arith.constant 0.000000e+00 : f32
    %114 = vector.broadcast %cst_52 : f32 to vector<6x154xf32>
    %115 = arith.maximumf %113, %114 : vector<6x154xf32>
    %116 = arith.maximumf %109, %115 : vector<6x154xf32>
    %117 = vector.broadcast %93 : vector<6x1xf32> to vector<6x154xf32>
    %118 = arith.mulf %65, %117 : vector<6x154xf32>
    %119 = vector.broadcast %96 : vector<6x1xf32> to vector<6x154xf32>
    %120 = arith.addf %118, %119 : vector<6x154xf32>
    %cst_53 = arith.constant 0.000000e+00 : f32
    %121 = vector.broadcast %cst_53 : f32 to vector<6x154xf32>
    %122 = arith.maximumf %120, %121 : vector<6x154xf32>
    %123 = arith.maximumf %116, %122 : vector<6x154xf32>
    %cst_54 = arith.constant 0.000000e+00 : f32
    %124 = vector.broadcast %cst_54 : f32 to vector<1x5xf32>
    %125 = vector.extract_strided_slice %123 {offsets = [0, 0], sizes = [1, 154], strides = [1, 1]} : vector<6x154xf32> to vector<1x154xf32>
    %c0_55 = arith.constant 0 : index
    %c0_56 = arith.constant 0 : index
    %c0_57 = arith.constant 0 : index
    %126 = vector.load %arg5[%c0_55, %c0_56, %c0_57] : memref<6x154x5xf32, #tpu.memory_space<vmem>>, vector<1x154x5xf32>
    %127 = vector.shape_cast %126 : vector<1x154x5xf32> to vector<154x5xf32>
    %cst_58 = arith.constant dense<0.000000e+00> : vector<1x5xf32>
    %128 = tpu.matmul %125, %127, %cst_58 {dimension_numbers = #tpu.dot_dimension_numbers<[1], [0], [0], [1], [0, 0, 1, 1], [], []>} : vector<1x154xf32>, vector<154x5xf32>, vector<1x5xf32> -> vector<1x5xf32>
    %129 = arith.addf %124, %128 : vector<1x5xf32>
    %130 = vector.extract_strided_slice %123 {offsets = [1, 0], sizes = [1, 154], strides = [1, 1]} : vector<6x154xf32> to vector<1x154xf32>
    %c1_59 = arith.constant 1 : index
    %c0_60 = arith.constant 0 : index
    %c0_61 = arith.constant 0 : index
    %131 = vector.load %arg5[%c1_59, %c0_60, %c0_61] : memref<6x154x5xf32, #tpu.memory_space<vmem>>, vector<1x154x5xf32>
    %132 = vector.shape_cast %131 : vector<1x154x5xf32> to vector<154x5xf32>
    %cst_62 = arith.constant dense<0.000000e+00> : vector<1x5xf32>
    %133 = tpu.matmul %130, %132, %cst_62 {dimension_numbers = #tpu.dot_dimension_numbers<[1], [0], [0], [1], [0, 0, 1, 1], [], []>} : vector<1x154xf32>, vector<154x5xf32>, vector<1x5xf32> -> vector<1x5xf32>
    %134 = arith.addf %129, %133 : vector<1x5xf32>
    %135 = vector.extract_strided_slice %123 {offsets = [2, 0], sizes = [1, 154], strides = [1, 1]} : vector<6x154xf32> to vector<1x154xf32>
    %c2_63 = arith.constant 2 : index
    %c0_64 = arith.constant 0 : index
    %c0_65 = arith.constant 0 : index
    %136 = vector.load %arg5[%c2_63, %c0_64, %c0_65] : memref<6x154x5xf32, #tpu.memory_space<vmem>>, vector<1x154x5xf32>
    %137 = vector.shape_cast %136 : vector<1x154x5xf32> to vector<154x5xf32>
    %cst_66 = arith.constant dense<0.000000e+00> : vector<1x5xf32>
    %138 = tpu.matmul %135, %137, %cst_66 {dimension_numbers = #tpu.dot_dimension_numbers<[1], [0], [0], [1], [0, 0, 1, 1], [], []>} : vector<1x154xf32>, vector<154x5xf32>, vector<1x5xf32> -> vector<1x5xf32>
    %139 = arith.addf %134, %138 : vector<1x5xf32>
    %140 = vector.extract_strided_slice %123 {offsets = [3, 0], sizes = [1, 154], strides = [1, 1]} : vector<6x154xf32> to vector<1x154xf32>
    %c3_67 = arith.constant 3 : index
    %c0_68 = arith.constant 0 : index
    %c0_69 = arith.constant 0 : index
    %141 = vector.load %arg5[%c3_67, %c0_68, %c0_69] : memref<6x154x5xf32, #tpu.memory_space<vmem>>, vector<1x154x5xf32>
    %142 = vector.shape_cast %141 : vector<1x154x5xf32> to vector<154x5xf32>
    %cst_70 = arith.constant dense<0.000000e+00> : vector<1x5xf32>
    %143 = tpu.matmul %140, %142, %cst_70 {dimension_numbers = #tpu.dot_dimension_numbers<[1], [0], [0], [1], [0, 0, 1, 1], [], []>} : vector<1x154xf32>, vector<154x5xf32>, vector<1x5xf32> -> vector<1x5xf32>
    %144 = arith.addf %139, %143 : vector<1x5xf32>
    %145 = vector.extract_strided_slice %123 {offsets = [4, 0], sizes = [1, 154], strides = [1, 1]} : vector<6x154xf32> to vector<1x154xf32>
    %c4_71 = arith.constant 4 : index
    %c0_72 = arith.constant 0 : index
    %c0_73 = arith.constant 0 : index
    %146 = vector.load %arg5[%c4_71, %c0_72, %c0_73] : memref<6x154x5xf32, #tpu.memory_space<vmem>>, vector<1x154x5xf32>
    %147 = vector.shape_cast %146 : vector<1x154x5xf32> to vector<154x5xf32>
    %cst_74 = arith.constant dense<0.000000e+00> : vector<1x5xf32>
    %148 = tpu.matmul %145, %147, %cst_74 {dimension_numbers = #tpu.dot_dimension_numbers<[1], [0], [0], [1], [0, 0, 1, 1], [], []>} : vector<1x154xf32>, vector<154x5xf32>, vector<1x5xf32> -> vector<1x5xf32>
    %149 = arith.addf %144, %148 : vector<1x5xf32>
    %150 = vector.extract_strided_slice %123 {offsets = [5, 0], sizes = [1, 154], strides = [1, 1]} : vector<6x154xf32> to vector<1x154xf32>
    %c5_75 = arith.constant 5 : index
    %c0_76 = arith.constant 0 : index
    %c0_77 = arith.constant 0 : index
    %151 = vector.load %arg5[%c5_75, %c0_76, %c0_77] : memref<6x154x5xf32, #tpu.memory_space<vmem>>, vector<1x154x5xf32>
    %152 = vector.shape_cast %151 : vector<1x154x5xf32> to vector<154x5xf32>
    %cst_78 = arith.constant dense<0.000000e+00> : vector<1x5xf32>
    %153 = tpu.matmul %150, %152, %cst_78 {dimension_numbers = #tpu.dot_dimension_numbers<[1], [0], [0], [1], [0, 0, 1, 1], [], []>} : vector<1x154xf32>, vector<154x5xf32>, vector<1x5xf32> -> vector<1x5xf32>
    %154 = arith.addf %149, %153 : vector<1x5xf32>
    %c0_79 = arith.constant 0 : index
    %c0_80 = arith.constant 0 : index
    %155 = vector.load %arg6[%c0_79, %c0_80] : memref<1x5xf32, #tpu.memory_space<vmem>>, vector<1x5xf32>
    %156 = arith.addf %154, %155 : vector<1x5xf32>
    %cst_81 = arith.constant 0.000000e+00 : f32
    %157 = vector.broadcast %cst_81 : f32 to vector<1x5xf32>
    %158 = arith.maximumf %156, %157 : vector<1x5xf32>
    %159 = arith.negf %158 : vector<1x5xf32>
    %160 = math.exp %159 : vector<1x5xf32>
    %cst_82 = arith.constant 1.000000e+00 : f32
    %161 = vector.broadcast %cst_82 : f32 to vector<1x5xf32>
    %162 = arith.addf %161, %160 : vector<1x5xf32>
    %163 = arith.divf %161, %162 : vector<1x5xf32>
    %c0_83 = arith.constant 0 : index
    %c0_84 = arith.constant 0 : index
    %164 = vector.load %arg7[%c0_83, %c0_84] : memref<2x5xf32, #tpu.memory_space<vmem>>, vector<1x5xf32>
    tpu.vector_store %arg7[%c0_83, %c0_84], %163 {strides = array<i32>} : memref<2x5xf32, #tpu.memory_space<vmem>>, vector<1x5xf32>,
    %165 = vector.broadcast %93 : vector<6x1xf32> to vector<6x154xf32>
    %166 = arith.mulf %15, %165 : vector<6x154xf32>
    %167 = vector.broadcast %96 : vector<6x1xf32> to vector<6x154xf32>
    %168 = arith.addf %166, %167 : vector<6x154xf32>
    %cst_85 = arith.constant 0.000000e+00 : f32
    %169 = vector.broadcast %cst_85 : f32 to vector<6x154xf32>
    %170 = arith.maximumf %168, %169 : vector<6x154xf32>
    %171 = vector.broadcast %93 : vector<6x1xf32> to vector<6x154xf32>
    %172 = arith.mulf %35, %171 : vector<6x154xf32>
    %173 = vector.broadcast %96 : vector<6x1xf32> to vector<6x154xf32>
    %174 = arith.addf %172, %173 : vector<6x154xf32>
    %cst_86 = arith.constant 0.000000e+00 : f32
    %175 = vector.broadcast %cst_86 : f32 to vector<6x154xf32>
    %176 = arith.maximumf %174, %175 : vector<6x154xf32>
    %177 = arith.maximumf %170, %176 : vector<6x154xf32>
    %178 = vector.broadcast %93 : vector<6x1xf32> to vector<6x154xf32>
    %179 = arith.mulf %55, %178 : vector<6x154xf32>
    %180 = vector.broadcast %96 : vector<6x1xf32> to vector<6x154xf32>
    %181 = arith.addf %179, %180 : vector<6x154xf32>
    %cst_87 = arith.constant 0.000000e+00 : f32
    %182 = vector.broadcast %cst_87 : f32 to vector<6x154xf32>
    %183 = arith.maximumf %181, %182 : vector<6x154xf32>
    %184 = arith.maximumf %177, %183 : vector<6x154xf32>
    %185 = vector.broadcast %93 : vector<6x1xf32> to vector<6x154xf32>
    %186 = arith.mulf %75, %185 : vector<6x154xf32>
    %187 = vector.broadcast %96 : vector<6x1xf32> to vector<6x154xf32>
    %188 = arith.addf %186, %187 : vector<6x154xf32>
    %cst_88 = arith.constant 0.000000e+00 : f32
    %189 = vector.broadcast %cst_88 : f32 to vector<6x154xf32>
    %190 = arith.maximumf %188, %189 : vector<6x154xf32>
    %191 = arith.maximumf %184, %190 : vector<6x154xf32>
    %cst_89 = arith.constant 0.000000e+00 : f32
    %192 = vector.broadcast %cst_89 : f32 to vector<1x5xf32>
    %193 = vector.extract_strided_slice %191 {offsets = [0, 0], sizes = [1, 154], strides = [1, 1]} : vector<6x154xf32> to vector<1x154xf32>
    %c0_90 = arith.constant 0 : index
    %c0_91 = arith.constant 0 : index
    %c0_92 = arith.constant 0 : index
    %194 = vector.load %arg5[%c0_90, %c0_91, %c0_92] : memref<6x154x5xf32, #tpu.memory_space<vmem>>, vector<1x154x5xf32>
    %195 = vector.shape_cast %194 : vector<1x154x5xf32> to vector<154x5xf32>
    %cst_93 = arith.constant dense<0.000000e+00> : vector<1x5xf32>
    %196 = tpu.matmul %193, %195, %cst_93 {dimension_numbers = #tpu.dot_dimension_numbers<[1], [0], [0], [1], [0, 0, 1, 1], [], []>} : vector<1x154xf32>, vector<154x5xf32>, vector<1x5xf32> -> vector<1x5xf32>
    %197 = arith.addf %192, %196 : vector<1x5xf32>
    %198 = vector.extract_strided_slice %191 {offsets = [1, 0], sizes = [1, 154], strides = [1, 1]} : vector<6x154xf32> to vector<1x154xf32>
    %c1_94 = arith.constant 1 : index
    %c0_95 = arith.constant 0 : index
    %c0_96 = arith.constant 0 : index
    %199 = vector.load %arg5[%c1_94, %c0_95, %c0_96] : memref<6x154x5xf32, #tpu.memory_space<vmem>>, vector<1x154x5xf32>
    %200 = vector.shape_cast %199 : vector<1x154x5xf32> to vector<154x5xf32>
    %cst_97 = arith.constant dense<0.000000e+00> : vector<1x5xf32>
    %201 = tpu.matmul %198, %200, %cst_97 {dimension_numbers = #tpu.dot_dimension_numbers<[1], [0], [0], [1], [0, 0, 1, 1], [], []>} : vector<1x154xf32>, vector<154x5xf32>, vector<1x5xf32> -> vector<1x5xf32>
    %202 = arith.addf %197, %201 : vector<1x5xf32>
    %203 = vector.extract_strided_slice %191 {offsets = [2, 0], sizes = [1, 154], strides = [1, 1]} : vector<6x154xf32> to vector<1x154xf32>
    %c2_98 = arith.constant 2 : index
    %c0_99 = arith.constant 0 : index
    %c0_100 = arith.constant 0 : index
    %204 = vector.load %arg5[%c2_98, %c0_99, %c0_100] : memref<6x154x5xf32, #tpu.memory_space<vmem>>, vector<1x154x5xf32>
    %205 = vector.shape_cast %204 : vector<1x154x5xf32> to vector<154x5xf32>
    %cst_101 = arith.constant dense<0.000000e+00> : vector<1x5xf32>
    %206 = tpu.matmul %203, %205, %cst_101 {dimension_numbers = #tpu.dot_dimension_numbers<[1], [0], [0], [1], [0, 0, 1, 1], [], []>} : vector<1x154xf32>, vector<154x5xf32>, vector<1x5xf32> -> vector<1x5xf32>
    %207 = arith.addf %202, %206 : vector<1x5xf32>
    %208 = vector.extract_strided_slice %191 {offsets = [3, 0], sizes = [1, 154], strides = [1, 1]} : vector<6x154xf32> to vector<1x154xf32>
    %c3_102 = arith.constant 3 : index
    %c0_103 = arith.constant 0 : index
    %c0_104 = arith.constant 0 : index
    %209 = vector.load %arg5[%c3_102, %c0_103, %c0_104] : memref<6x154x5xf32, #tpu.memory_space<vmem>>, vector<1x154x5xf32>
    %210 = vector.shape_cast %209 : vector<1x154x5xf32> to vector<154x5xf32>
    %cst_105 = arith.constant dense<0.000000e+00> : vector<1x5xf32>
    %211 = tpu.matmul %208, %210, %cst_105 {dimension_numbers = #tpu.dot_dimension_numbers<[1], [0], [0], [1], [0, 0, 1, 1], [], []>} : vector<1x154xf32>, vector<154x5xf32>, vector<1x5xf32> -> vector<1x5xf32>
    %212 = arith.addf %207, %211 : vector<1x5xf32>
    %213 = vector.extract_strided_slice %191 {offsets = [4, 0], sizes = [1, 154], strides = [1, 1]} : vector<6x154xf32> to vector<1x154xf32>
    %c4_106 = arith.constant 4 : index
    %c0_107 = arith.constant 0 : index
    %c0_108 = arith.constant 0 : index
    %214 = vector.load %arg5[%c4_106, %c0_107, %c0_108] : memref<6x154x5xf32, #tpu.memory_space<vmem>>, vector<1x154x5xf32>
    %215 = vector.shape_cast %214 : vector<1x154x5xf32> to vector<154x5xf32>
    %cst_109 = arith.constant dense<0.000000e+00> : vector<1x5xf32>
    %216 = tpu.matmul %213, %215, %cst_109 {dimension_numbers = #tpu.dot_dimension_numbers<[1], [0], [0], [1], [0, 0, 1, 1], [], []>} : vector<1x154xf32>, vector<154x5xf32>, vector<1x5xf32> -> vector<1x5xf32>
    %217 = arith.addf %212, %216 : vector<1x5xf32>
    %218 = vector.extract_strided_slice %191 {offsets = [5, 0], sizes = [1, 154], strides = [1, 1]} : vector<6x154xf32> to vector<1x154xf32>
    %c5_110 = arith.constant 5 : index
    %c0_111 = arith.constant 0 : index
    %c0_112 = arith.constant 0 : index
    %219 = vector.load %arg5[%c5_110, %c0_111, %c0_112] : memref<6x154x5xf32, #tpu.memory_space<vmem>>, vector<1x154x5xf32>
    %220 = vector.shape_cast %219 : vector<1x154x5xf32> to vector<154x5xf32>
    %cst_113 = arith.constant dense<0.000000e+00> : vector<1x5xf32>
    %221 = tpu.matmul %218, %220, %cst_113 {dimension_numbers = #tpu.dot_dimension_numbers<[1], [0], [0], [1], [0, 0, 1, 1], [], []>} : vector<1x154xf32>, vector<154x5xf32>, vector<1x5xf32> -> vector<1x5xf32>
    %222 = arith.addf %217, %221 : vector<1x5xf32>
    %c0_114 = arith.constant 0 : index
    %c0_115 = arith.constant 0 : index
    %223 = vector.load %arg6[%c0_114, %c0_115] : memref<1x5xf32, #tpu.memory_space<vmem>>, vector<1x5xf32>
    %224 = arith.addf %222, %223 : vector<1x5xf32>
    %cst_116 = arith.constant 0.000000e+00 : f32
    %225 = vector.broadcast %cst_116 : f32 to vector<1x5xf32>
    %226 = arith.maximumf %224, %225 : vector<1x5xf32>
    %227 = arith.negf %226 : vector<1x5xf32>
    %228 = math.exp %227 : vector<1x5xf32>
    %cst_117 = arith.constant 1.000000e+00 : f32
    %229 = vector.broadcast %cst_117 : f32 to vector<1x5xf32>
    %230 = arith.addf %229, %228 : vector<1x5xf32>
    %231 = arith.divf %229, %230 : vector<1x5xf32>
    %c1_118 = arith.constant 1 : index
    %c0_119 = arith.constant 0 : index
    %232 = vector.load %arg7[%c1_118, %c0_119] : memref<2x5xf32, #tpu.memory_space<vmem>>, vector<1x5xf32>
    tpu.vector_store %arg7[%c1_118, %c0_119], %231 {strides = array<i32>} : memref<2x5xf32, #tpu.memory_space<vmem>>, vector<1x5xf32>,
    return
  }
  func.func @transform_0(%arg0: i32) -> (i32, i32, i32) {
    %c0_i32 = arith.constant 0 : i32
    %c0_i32_0 = arith.constant 0 : i32
    %c0_i32_1 = arith.constant 0 : i32
    %c0_i32_2 = arith.constant 0 : i32
    return %c0_i32, %c0_i32_0, %c0_i32_1 : i32, i32, i32
  }
  func.func @transform_1(%arg0: i32) -> (i32, i32) {
    %c0_i32 = arith.constant 0 : i32
    %c0_i32_0 = arith.constant 0 : i32
    %c0_i32_1 = arith.constant 0 : i32
    return %c0_i32, %c0_i32_0 : i32, i32
  }
  func.func @transform_2(%arg0: i32) -> (i32, i32) {
    %c0_i32 = arith.constant 0 : i32
    %c0_i32_0 = arith.constant 0 : i32
    %c0_i32_1 = arith.constant 0 : i32
    return %c0_i32, %c0_i32_0 : i32, i32
  }
  func.func @transform_3(%arg0: i32) -> (i32, i32) {
    %c0_i32 = arith.constant 0 : i32
    %c0_i32_0 = arith.constant 0 : i32
    %c0_i32_1 = arith.constant 0 : i32
    return %c0_i32, %c0_i32_0 : i32, i32
  }
  func.func @transform_4(%arg0: i32) -> (i32, i32, i32) {
    %c0_i32 = arith.constant 0 : i32
    %c0_i32_0 = arith.constant 0 : i32
    %c0_i32_1 = arith.constant 0 : i32
    %c0_i32_2 = arith.constant 0 : i32
    return %c0_i32, %c0_i32_0, %c0_i32_1 : i32, i32, i32
  }
  func.func @transform_5(%arg0: i32) -> (i32, i32) {
    %c0_i32 = arith.constant 0 : i32
    %c0_i32_0 = arith.constant 0 : i32
    %c0_i32_1 = arith.constant 0 : i32
    return %c0_i32, %c0_i32_0 : i32, i32
  }
  func.func @transform_6(%arg0: i32) -> (i32, i32) {
    %c0_i32 = arith.constant 0 : i32
    %c0_i32_0 = arith.constant 0 : i32
    %c0_i32_1 = arith.constant 0 : i32
    return %c0_i32, %c0_i32_0 : i32, i32
  }
}

</mosaic_0001>

<llo_original>
// kernel: cnn_forward.1
$region0: #{cnn_forward.1}
  #allocation0 [shape = 'u32[]', space=smem, size = 0x4, offset = 0x4, fixed_abs, tag = 'smem constant byte address 0x4 - core index']
  #allocation1 [shape = 'u32[144,128]{1,0:T(1,128)}', space=vmem, size = 0x12000, scoped, tag = 'internal scratch']
  %s0 = inlined_call_operand.vmem [shape: bf16[8,36,154], index: 0, kind: input, shape index: {}]
  %s1 = inlined_call_operand.vmem [shape: bf16[6,36], index: 1, kind: input, shape index: {}]
  %s2 = inlined_call_operand.vmem [shape: f32[6,1], index: 2, kind: input, shape index: {}]
  %s3 = inlined_call_operand.vmem [shape: f32[6,1], index: 3, kind: input, shape index: {}]
  %s4 = inlined_call_operand.vmem [shape: f32[6,154,5], index: 4, kind: input, shape index: {}]
  %s5 = inlined_call_operand.vmem [shape: f32[1,5], index: 5, kind: input, shape index: {}]
  %s6 = inlined_call_operand.hbm [shape: f32[2,5], index: 6, kind: output, shape index: {}]
  %s7 = sld [smem:[#allocation0]]
  $region34: #{cnn_forward.1} parent=0
    _
  %s9 = ssub.s32 1, %s7
  %s10 = scalar_select 0, %s9, %s7
  $region1: #{cnn_forward.1} parent=0
    #allocation2 [shape = 'u8[1024]{0}', space=vmem, size = 0x400, scoped, tag = 'output window, operand 0, single buffered']
    #allocation3 [shape = 's32[1]{0}', space=sflag, size = 0x4, scoped, tag = 'scoped memory for cnn_forward.1']
    %11 = vsyncpa [#allocation3], 0
    // Predicated region
    $region2: #{cnn_forward.1} parent=1 // pred_check
      _
    $region3: #{cnn_forward.1} parent=1 // pred_check_branch
      %13 = sbr.rel (0) target = $region5
    $region4: #{cnn_forward.1} parent=1 // pred_region
      _
    $region5: #{cnn_forward.1} parent=1 // pred_fallthru
      _
    // Predicated region
    $region6: #{cnn_forward.1} parent=1 // pred_check
      _
    $region7: #{cnn_forward.1} parent=1 // pred_check_branch
      %15 = sbr.rel (0) target = $region9
    $region8: #{cnn_forward.1} parent=1 // pred_region
      _
    $region9: #{cnn_forward.1} parent=1 // pred_fallthru
      _
    // Predicated region
    $region10: #{cnn_forward.1} parent=1 // pred_check
      _
    $region11: #{cnn_forward.1} parent=1 // pred_check_branch
      %17 = sbr.rel (0) target = $region13
    $region12: #{cnn_forward.1} parent=1 // pred_region
      _
    $region13: #{cnn_forward.1} parent=1 // pred_fallthru
      _
    // Predicated region
    $region14: #{cnn_forward.1} parent=1 // pred_check
      _
    $region15: #{cnn_forward.1} parent=1 // pred_check_branch
      %19 = sbr.rel (0) target = $region17
    $region16: #{cnn_forward.1} parent=1 // pred_region
      _
    $region17: #{cnn_forward.1} parent=1 // pred_fallthru
      _
    // Predicated region
    $region18: #{cnn_forward.1} parent=1 // pred_check
      _
    $region19: #{cnn_forward.1} parent=1 // pred_check_branch
      %21 = sbr.rel (0) target = $region21
    $region20: #{cnn_forward.1} parent=1 // pred_region
      _
    $region21: #{cnn_forward.1} parent=1 // pred_fallthru
      _
    // Predicated region
    $region22: #{cnn_forward.1} parent=1 // pred_check
      _
    $region23: #{cnn_forward.1} parent=1 // pred_check_branch
      %23 = sbr.rel (0) target = $region25
    $region24: #{cnn_forward.1} parent=1 // pred_region
      _
    $region25: #{cnn_forward.1} parent=1 // pred_fallthru
      _
    %v25 = vld [vmem:[%s1] sm:$0x7]
    %v26 = vld [vmem:[%s0] sm:$0xff]
    %v27 = vld [vmem:[%s0 + $0x8] sm:$0xff]
    %v28 = vld [vmem:[%s0 + $0x10] sm:$0xff]
    %v29 = vld [vmem:[%s0 + $0x18] sm:$0xff]
    %v30 = vld [vmem:[%s0 + $0x20] sm:$0x33]
    %v36 = vunpack.c.l.b16 %v26
    %v37 = vunpack.c.h.b16 %v26
    %v38 = vunpack.c.l.b16 %v27
    %v39 = vunpack.c.h.b16 %v27
    %v40 = vunpack.c.l.b16 %v28
    %v41 = vunpack.c.h.b16 %v28
    %v42 = vunpack.c.l.b16 %v29
    %v43 = vunpack.c.h.b16 %v29
    %v44 = vunpack.c.l.b16 %v30
    %v45 = vunpack.c.h.b16 %v30
    %v46 = vpack.c.b16 %v38, %v36
    %v47 = vpack.c.b16 %v39, %v37
    %v48 = vpack.c.b16 %v42, %v40
    %v49 = vpack.c.b16 %v43, %v41
    %v50 = vpack.c.b16 %v44, %v44
    %v51 = vpack.c.b16 %v45, %v45
    %vm56 = vcmask 293888
    %v58 = vsel %vm56, %v25, 0
    %vm60 = vcmask 1041408
    %v62 = vsel %vm60, %v50, 0
    %v65 = vsel %vm60, %v51, 0
    %67 = vmatprep.subr.bf16.mxu0 %v47
    %68 = vmatpush1.bf16.msra.mxu0 %v46
    %69 = vmatprep.subr.bf16.mxu0 %v49
    %70 = vmatpush1.bf16.msra.mxu0 %v48
    %71 = vmatprep.subr.bf16.mxu0 %v65
    %72 = vmatpush1.bf16.msra.mxu0 %v62
    %73 = vmatprep.subr.bf16.mxu0 0
    %74 = vmatpush1.bf16.msra.mxu0 0
    %75 = vmatprep.subr.bf16.mxu0 0
    %76 = vmatpush1.bf16.msra.mxu0 0
    %77 = vmatprep.subr.bf16.mxu0 0
    %78 = vmatpush1.bf16.msra.mxu0 0
    %79 = vmatprep.subr.bf16.mxu0 0
    %80 = vmatpush1.bf16.msra.mxu0 0
    %81 = vmatprep.subr.bf16.mxu0 0
    %82 = vmatpush1.bf16.msra.mxu0 0
    %83 = vmatprep.subr.bf16.mxu0 0
    %84 = vmatpush1.bf16.msra.mxu0 0
    %85 = vmatprep.subr.bf16.mxu0 0
    %86 = vmatpush1.bf16.msra.mxu0 0
    %87 = vmatprep.subr.bf16.mxu0 0
    %88 = vmatpush1.bf16.msra.mxu0 0
    %89 = vmatprep.subr.bf16.mxu0 0
    %90 = vmatpush1.bf16.msra.mxu0 0
    %91 = vmatprep.subr.bf16.mxu0 0
    %92 = vmatpush1.bf16.msra.mxu0 0
    %93 = vmatprep.subr.bf16.mxu0 0
    %94 = vmatpush1.bf16.msra.mxu0 0
    %95 = vmatprep.subr.bf16.mxu0 0
    %96 = vmatpush1.bf16.msra.mxu0 0
    %97 = vmatprep.subr.bf16.mxu0 0
    %98 = vmatpush1.bf16.msra.mxu0 0
    %99 = vmatprep.mubr.bf16.mxu0 0
    %100 = vmatmul.mubr.bf16.gmra.mrb[0].mxu0 %v58
    %v101 = vpop.f32.mrb[0].mxu0
    %v102 = vadd.f32 0.0, %v101
    %v103 = vpop.f32.mrb[0].mxu0
    %v104 = vadd.f32 0.0, %v103
    %v105 = vpop.f32.mrb[0].mxu0
    %v106 = vpop.f32.mrb[0].mxu0
    %107 = vdwg.mxu0
    %vm108 = vcmask 1045504
    %v109 = vsel %vm108, %v102, 0.0
    %vm110 = vcmask 209920
    %v111 = vsel %vm110, %v104, 0.0
    %v112 = vadd.f32 %v109, %v111
    %113 = vadd.xlane.f32.xlu0 %v112
    %v114 = vpop.xlane.xlu0 %113
    %v115 = vadd.f32 %v114, 0.0
    %v116 = vmul.f32 %v102, %v102
    %v117 = vmul.f32 %v104, %v104
    %v118 = vsel %vm108, %v116, 0.0
    %v119 = vsel %vm110, %v117, 0.0
    %v120 = vadd.f32 %v118, %v119
    %121 = vadd.xlane.f32.xlu0 %v120
    %v122 = vpop.xlane.xlu0 %121
    %v123 = vadd.f32 %v122, 0.0
    %s124 = scalar_lea.vmem %s0, 40
    %v125 = vld [vmem:[%s124] sm:$0xff]
    %v126 = vld [vmem:[%s124 + $0x8] sm:$0xff]
    %v127 = vld [vmem:[%s124 + $0x10] sm:$0xff]
    %v128 = vld [vmem:[%s124 + $0x18] sm:$0xff]
    %v129 = vld [vmem:[%s124 + $0x20] sm:$0x33]
    %v135 = vunpack.c.l.b16 %v125
    %v136 = vunpack.c.h.b16 %v125
    %v137 = vunpack.c.l.b16 %v126
    %v138 = vunpack.c.h.b16 %v126
    %v139 = vunpack.c.l.b16 %v127
    %v140 = vunpack.c.h.b16 %v127
    %v141 = vunpack.c.l.b16 %v128
    %v142 = vunpack.c.h.b16 %v128
    %v143 = vunpack.c.l.b16 %v129
    %v144 = vunpack.c.h.b16 %v129
    %v145 = vpack.c.b16 %v137, %v135
    %v146 = vpack.c.b16 %v138, %v136
    %v147 = vpack.c.b16 %v141, %v139
    %v148 = vpack.c.b16 %v142, %v140
    %v149 = vpack.c.b16 %v143, %v143
    %v150 = vpack.c.b16 %v144, %v144
    %v156 = vsel %vm60, %v149, 0
    %v159 = vsel %vm60, %v150, 0
    %161 = vmatprep.subr.bf16.mxu0 %v146
    %162 = vmatpush1.bf16.msra.mxu0 %v145
    %163 = vmatprep.subr.bf16.mxu0 %v148
    %164 = vmatpush1.bf16.msra.mxu0 %v147
    %165 = vmatprep.subr.bf16.mxu0 %v159
    %166 = vmatpush1.bf16.msra.mxu0 %v156
    %167 = vmatprep.subr.bf16.mxu0 0
    %168 = vmatpush1.bf16.msra.mxu0 0
    %169 = vmatprep.subr.bf16.mxu0 0
    %170 = vmatpush1.bf16.msra.mxu0 0
    %171 = vmatprep.subr.bf16.mxu0 0
    %172 = vmatpush1.bf16.msra.mxu0 0
    %173 = vmatprep.subr.bf16.mxu0 0
    %174 = vmatpush1.bf16.msra.mxu0 0
    %175 = vmatprep.subr.bf16.mxu0 0
    %176 = vmatpush1.bf16.msra.mxu0 0
    %177 = vmatprep.subr.bf16.mxu0 0
    %178 = vmatpush1.bf16.msra.mxu0 0
    %179 = vmatprep.subr.bf16.mxu0 0
    %180 = vmatpush1.bf16.msra.mxu0 0
    %181 = vmatprep.subr.bf16.mxu0 0
    %182 = vmatpush1.bf16.msra.mxu0 0
    %183 = vmatprep.subr.bf16.mxu0 0
    %184 = vmatpush1.bf16.msra.mxu0 0
    %185 = vmatprep.subr.bf16.mxu0 0
    %186 = vmatpush1.bf16.msra.mxu0 0
    %187 = vmatprep.subr.bf16.mxu0 0
    %188 = vmatpush1.bf16.msra.mxu0 0
    %189 = vmatprep.subr.bf16.mxu0 0
    %190 = vmatpush1.bf16.msra.mxu0 0
    %191 = vmatprep.subr.bf16.mxu0 0
    %192 = vmatpush1.bf16.msra.mxu0 0
    %193 = vmatprep.mubr.bf16.mxu0 0
    %194 = vmatmul.mubr.bf16.gmra.mrb[0].mxu0 %v58
    %v195 = vpop.f32.mrb[0].mxu0
    %v196 = vadd.f32 0.0, %v195
    %v197 = vpop.f32.mrb[0].mxu0
    %v198 = vadd.f32 0.0, %v197
    %v199 = vpop.f32.mrb[0].mxu0
    %v200 = vpop.f32.mrb[0].mxu0
    %201 = vdwg.mxu0
    %v202 = vsel %vm108, %v196, 0.0
    %v203 = vsel %vm110, %v198, 0.0
    %v204 = vadd.f32 %v202, %v203
    %205 = vadd.xlane.f32.xlu0 %v204
    %v206 = vpop.xlane.xlu0 %205
    %v207 = vadd.f32 %v115, %v206
    %v208 = vmul.f32 %v196, %v196
    %v209 = vmul.f32 %v198, %v198
    %v210 = vsel %vm108, %v208, 0.0
    %v211 = vsel %vm110, %v209, 0.0
    %v212 = vadd.f32 %v210, %v211
    %213 = vadd.xlane.f32.xlu0 %v212
    %v214 = vpop.xlane.xlu0 %213
    %v215 = vadd.f32 %v123, %v214
    %s216 = scalar_lea.vmem %s0, 80
    %v217 = vld [vmem:[%s216] sm:$0xff]
    %v218 = vld [vmem:[%s216 + $0x8] sm:$0xff]
    %v219 = vld [vmem:[%s216 + $0x10] sm:$0xff]
    %v220 = vld [vmem:[%s216 + $0x18] sm:$0xff]
    %v221 = vld [vmem:[%s216 + $0x20] sm:$0x33]
    %v227 = vunpack.c.l.b16 %v217
    %v228 = vunpack.c.h.b16 %v217
    %v229 = vunpack.c.l.b16 %v218
    %v230 = vunpack.c.h.b16 %v218
    %v231 = vunpack.c.l.b16 %v219
    %v232 = vunpack.c.h.b16 %v219
    %v233 = vunpack.c.l.b16 %v220
    %v234 = vunpack.c.h.b16 %v220
    %v235 = vunpack.c.l.b16 %v221
    %v236 = vunpack.c.h.b16 %v221
    %v237 = vpack.c.b16 %v229, %v227
    %v238 = vpack.c.b16 %v230, %v228
    %v239 = vpack.c.b16 %v233, %v231
    %v240 = vpack.c.b16 %v234, %v232
    %v241 = vpack.c.b16 %v235, %v235
    %v242 = vpack.c.b16 %v236, %v236
    %v248 = vsel %vm60, %v241, 0
    %v251 = vsel %vm60, %v242, 0
    %253 = vmatprep.subr.bf16.mxu0 %v238
    %254 = vmatpush1.bf16.msra.mxu0 %v237
    %255 = vmatprep.subr.bf16.mxu0 %v240
    %256 = vmatpush1.bf16.msra.mxu0 %v239
    %257 = vmatprep.subr.bf16.mxu0 %v251
    %258 = vmatpush1.bf16.msra.mxu0 %v248
    %259 = vmatprep.subr.bf16.mxu0 0
    %260 = vmatpush1.bf16.msra.mxu0 0
    %261 = vmatprep.subr.bf16.mxu0 0
    %262 = vmatpush1.bf16.msra.mxu0 0
    %263 = vmatprep.subr.bf16.mxu0 0
    %264 = vmatpush1.bf16.msra.mxu0 0
    %265 = vmatprep.subr.bf16.mxu0 0
    %266 = vmatpush1.bf16.msra.mxu0 0
    %267 = vmatprep.subr.bf16.mxu0 0
    %268 = vmatpush1.bf16.msra.mxu0 0
    %269 = vmatprep.subr.bf16.mxu0 0
    %270 = vmatpush1.bf16.msra.mxu0 0
    %271 = vmatprep.subr.bf16.mxu0 0
    %272 = vmatpush1.bf16.msra.mxu0 0
    %273 = vmatprep.subr.bf16.mxu0 0
    %274 = vmatpush1.bf16.msra.mxu0 0
    %275 = vmatprep.subr.bf16.mxu0 0
    %276 = vmatpush1.bf16.msra.mxu0 0
    %277 = vmatprep.subr.bf16.mxu0 0
    %278 = vmatpush1.bf16.msra.mxu0 0
    %279 = vmatprep.subr.bf16.mxu0 0
    %280 = vmatpush1.bf16.msra.mxu0 0
    %281 = vmatprep.subr.bf16.mxu0 0
    %282 = vmatpush1.bf16.msra.mxu0 0
    %283 = vmatprep.subr.bf16.mxu0 0
    %284 = vmatpush1.bf16.msra.mxu0 0
    %285 = vmatprep.mubr.bf16.mxu0 0
    %286 = vmatmul.mubr.bf16.gmra.mrb[0].mxu0 %v58
    %v287 = vpop.f32.mrb[0].mxu0
    %v288 = vadd.f32 0.0, %v287
    %v289 = vpop.f32.mrb[0].mxu0
    %v290 = vadd.f32 0.0, %v289
    %v291 = vpop.f32.mrb[0].mxu0
    %v292 = vpop.f32.mrb[0].mxu0
    %293 = vdwg.mxu0
    %v294 = vsel %vm108, %v288, 0.0
    %v295 = vsel %vm110, %v290, 0.0
    %v296 = vadd.f32 %v294, %v295
    %297 = vadd.xlane.f32.xlu0 %v296
    %v298 = vpop.xlane.xlu0 %297
    %v299 = vadd.f32 %v207, %v298
    %v300 = vmul.f32 %v288, %v288
    %v301 = vmul.f32 %v290, %v290
    %v302 = vsel %vm108, %v300, 0.0
    %v303 = vsel %vm110, %v301, 0.0
    %v304 = vadd.f32 %v302, %v303
    %305 = vadd.xlane.f32.xlu0 %v304
    %v306 = vpop.xlane.xlu0 %305
    %v307 = vadd.f32 %v215, %v306
    %s308 = scalar_lea.vmem %s0, 120
    %v309 = vld [vmem:[%s308] sm:$0xff]
    %v310 = vld [vmem:[%s308 + $0x8] sm:$0xff]
    %v311 = vld [vmem:[%s308 + $0x10] sm:$0xff]
    %v312 = vld [vmem:[%s308 + $0x18] sm:$0xff]
    %v313 = vld [vmem:[%s308 + $0x20] sm:$0x33]
    %v319 = vunpack.c.l.b16 %v309
    %v320 = vunpack.c.h.b16 %v309
    %v321 = vunpack.c.l.b16 %v310
    %v322 = vunpack.c.h.b16 %v310
    %v323 = vunpack.c.l.b16 %v311
    %v324 = vunpack.c.h.b16 %v311
    %v325 = vunpack.c.l.b16 %v312
    %v326 = vunpack.c.h.b16 %v312
    %v327 = vunpack.c.l.b16 %v313
    %v328 = vunpack.c.h.b16 %v313
    %v329 = vpack.c.b16 %v321, %v319
    %v330 = vpack.c.b16 %v322, %v320
    %v331 = vpack.c.b16 %v325, %v323
    %v332 = vpack.c.b16 %v326, %v324
    %v333 = vpack.c.b16 %v327, %v327
    %v334 = vpack.c.b16 %v328, %v328
    %v340 = vsel %vm60, %v333, 0
    %v343 = vsel %vm60, %v334, 0
    %345 = vmatprep.subr.bf16.mxu0 %v330
    %346 = vmatpush1.bf16.msra.mxu0 %v329
    %347 = vmatprep.subr.bf16.mxu0 %v332
    %348 = vmatpush1.bf16.msra.mxu0 %v331
    %349 = vmatprep.subr.bf16.mxu0 %v343
    %350 = vmatpush1.bf16.msra.mxu0 %v340
    %351 = vmatprep.subr.bf16.mxu0 0
    %352 = vmatpush1.bf16.msra.mxu0 0
    %353 = vmatprep.subr.bf16.mxu0 0
    %354 = vmatpush1.bf16.msra.mxu0 0
    %355 = vmatprep.subr.bf16.mxu0 0
    %356 = vmatpush1.bf16.msra.mxu0 0
    %357 = vmatprep.subr.bf16.mxu0 0
    %358 = vmatpush1.bf16.msra.mxu0 0
    %359 = vmatprep.subr.bf16.mxu0 0
    %360 = vmatpush1.bf16.msra.mxu0 0
    %361 = vmatprep.subr.bf16.mxu0 0
    %362 = vmatpush1.bf16.msra.mxu0 0
    %363 = vmatprep.subr.bf16.mxu0 0
    %364 = vmatpush1.bf16.msra.mxu0 0
    %365 = vmatprep.subr.bf16.mxu0 0
    %366 = vmatpush1.bf16.msra.mxu0 0
    %367 = vmatprep.subr.bf16.mxu0 0
    %368 = vmatpush1.bf16.msra.mxu0 0
    %369 = vmatprep.subr.bf16.mxu0 0
    %370 = vmatpush1.bf16.msra.mxu0 0
    %371 = vmatprep.subr.bf16.mxu0 0
    %372 = vmatpush1.bf16.msra.mxu0 0
    %373 = vmatprep.subr.bf16.mxu0 0
    %374 = vmatpush1.bf16.msra.mxu0 0
    %375 = vmatprep.subr.bf16.mxu0 0
    %376 = vmatpush1.bf16.msra.mxu0 0
    %377 = vmatprep.mubr.bf16.mxu0 0
    %378 = vmatmul.mubr.bf16.gmra.mrb[0].mxu0 %v58
    %v379 = vpop.f32.mrb[0].mxu0
    %v380 = vadd.f32 0.0, %v379
    %v381 = vpop.f32.mrb[0].mxu0
    %v382 = vadd.f32 0.0, %v381
    %v383 = vpop.f32.mrb[0].mxu0
    %v384 = vpop.f32.mrb[0].mxu0
    %385 = vdwg.mxu0
    %v386 = vsel %vm108, %v380, 0.0
    %v387 = vsel %vm110, %v382, 0.0
    %v388 = vadd.f32 %v386, %v387
    %389 = vadd.xlane.f32.xlu0 %v388
    %v390 = vpop.xlane.xlu0 %389
    %v391 = vadd.f32 %v299, %v390
    %v392 = vmul.f32 %v380, %v380
    %v393 = vmul.f32 %v382, %v382
    %v394 = vsel %vm108, %v392, 0.0
    %v395 = vsel %vm110, %v393, 0.0
    %v396 = vadd.f32 %v394, %v395
    %397 = vadd.xlane.f32.xlu0 %v396
    %v398 = vpop.xlane.xlu0 %397
    %v399 = vadd.f32 %v307, %v398
    %s400 = scalar_lea.vmem %s0, 160
    %v401 = vld [vmem:[%s400] sm:$0xff]
    %v402 = vld [vmem:[%s400 + $0x8] sm:$0xff]
    %v403 = vld [vmem:[%s400 + $0x10] sm:$0xff]
    %v404 = vld [vmem:[%s400 + $0x18] sm:$0xff]
    %v405 = vld [vmem:[%s400 + $0x20] sm:$0x33]
    %v411 = vunpack.c.l.b16 %v401
    %v412 = vunpack.c.h.b16 %v401
    %v413 = vunpack.c.l.b16 %v402
    %v414 = vunpack.c.h.b16 %v402
    %v415 = vunpack.c.l.b16 %v403
    %v416 = vunpack.c.h.b16 %v403
    %v417 = vunpack.c.l.b16 %v404
    %v418 = vunpack.c.h.b16 %v404
    %v419 = vunpack.c.l.b16 %v405
    %v420 = vunpack.c.h.b16 %v405
    %v421 = vpack.c.b16 %v413, %v411
    %v422 = vpack.c.b16 %v414, %v412
    %v423 = vpack.c.b16 %v417, %v415
    %v424 = vpack.c.b16 %v418, %v416
    %v425 = vpack.c.b16 %v419, %v419
    %v426 = vpack.c.b16 %v420, %v420
    %v432 = vsel %vm60, %v425, 0
    %v435 = vsel %vm60, %v426, 0
    %437 = vmatprep.subr.bf16.mxu0 %v422
    %438 = vmatpush1.bf16.msra.mxu0 %v421
    %439 = vmatprep.subr.bf16.mxu0 %v424
    %440 = vmatpush1.bf16.msra.mxu0 %v423
    %441 = vmatprep.subr.bf16.mxu0 %v435
    %442 = vmatpush1.bf16.msra.mxu0 %v432
    %443 = vmatprep.subr.bf16.mxu0 0
    %444 = vmatpush1.bf16.msra.mxu0 0
    %445 = vmatprep.subr.bf16.mxu0 0
    %446 = vmatpush1.bf16.msra.mxu0 0
    %447 = vmatprep.subr.bf16.mxu0 0
    %448 = vmatpush1.bf16.msra.mxu0 0
    %449 = vmatprep.subr.bf16.mxu0 0
    %450 = vmatpush1.bf16.msra.mxu0 0
    %451 = vmatprep.subr.bf16.mxu0 0
    %452 = vmatpush1.bf16.msra.mxu0 0
    %453 = vmatprep.subr.bf16.mxu0 0
    %454 = vmatpush1.bf16.msra.mxu0 0
    %455 = vmatprep.subr.bf16.mxu0 0
    %456 = vmatpush1.bf16.msra.mxu0 0
    %457 = vmatprep.subr.bf16.mxu0 0
    %458 = vmatpush1.bf16.msra.mxu0 0
    %459 = vmatprep.subr.bf16.mxu0 0
    %460 = vmatpush1.bf16.msra.mxu0 0
    %461 = vmatprep.subr.bf16.mxu0 0
    %462 = vmatpush1.bf16.msra.mxu0 0
    %463 = vmatprep.subr.bf16.mxu0 0
    %464 = vmatpush1.bf16.msra.mxu0 0
    %465 = vmatprep.subr.bf16.mxu0 0
    %466 = vmatpush1.bf16.msra.mxu0 0
    %467 = vmatprep.subr.bf16.mxu0 0
    %468 = vmatpush1.bf16.msra.mxu0 0
    %469 = vmatprep.mubr.bf16.mxu0 0
    %470 = vmatmul.mubr.bf16.gmra.mrb[0].mxu0 %v58
    %v471 = vpop.f32.mrb[0].mxu0
    %v472 = vadd.f32 0.0, %v471
    %v473 = vpop.f32.mrb[0].mxu0
    %v474 = vadd.f32 0.0, %v473
    %v475 = vpop.f32.mrb[0].mxu0
    %v476 = vpop.f32.mrb[0].mxu0
    %477 = vdwg.mxu0
    %v478 = vsel %vm108, %v472, 0.0
    %v479 = vsel %vm110, %v474, 0.0
    %v480 = vadd.f32 %v478, %v479
    %481 = vadd.xlane.f32.xlu0 %v480
    %v482 = vpop.xlane.xlu0 %481
    %v483 = vadd.f32 %v391, %v482
    %v484 = vmul.f32 %v472, %v472
    %v485 = vmul.f32 %v474, %v474
    %v486 = vsel %vm108, %v484, 0.0
    %v487 = vsel %vm110, %v485, 0.0
    %v488 = vadd.f32 %v486, %v487
    %489 = vadd.xlane.f32.xlu0 %v488
    %v490 = vpop.xlane.xlu0 %489
    %v491 = vadd.f32 %v399, %v490
    %s492 = scalar_lea.vmem %s0, 200
    %v493 = vld [vmem:[%s492] sm:$0xff]
    %v494 = vld [vmem:[%s492 + $0x8] sm:$0xff]
    %v495 = vld [vmem:[%s492 + $0x10] sm:$0xff]
    %v496 = vld [vmem:[%s492 + $0x18] sm:$0xff]
    %v497 = vld [vmem:[%s492 + $0x20] sm:$0x33]
    %v503 = vunpack.c.l.b16 %v493
    %v504 = vunpack.c.h.b16 %v493
    %v505 = vunpack.c.l.b16 %v494
    %v506 = vunpack.c.h.b16 %v494
    %v507 = vunpack.c.l.b16 %v495
    %v508 = vunpack.c.h.b16 %v495
    %v509 = vunpack.c.l.b16 %v496
    %v510 = vunpack.c.h.b16 %v496
    %v511 = vunpack.c.l.b16 %v497
    %v512 = vunpack.c.h.b16 %v497
    %v513 = vpack.c.b16 %v505, %v503
    %v514 = vpack.c.b16 %v506, %v504
    %v515 = vpack.c.b16 %v509, %v507
    %v516 = vpack.c.b16 %v510, %v508
    %v517 = vpack.c.b16 %v511, %v511
    %v518 = vpack.c.b16 %v512, %v512
    %v524 = vsel %vm60, %v517, 0
    %v527 = vsel %vm60, %v518, 0
    %529 = vmatprep.subr.bf16.mxu0 %v514
    %530 = vmatpush1.bf16.msra.mxu0 %v513
    %531 = vmatprep.subr.bf16.mxu0 %v516
    %532 = vmatpush1.bf16.msra.mxu0 %v515
    %533 = vmatprep.subr.bf16.mxu0 %v527
    %534 = vmatpush1.bf16.msra.mxu0 %v524
    %535 = vmatprep.subr.bf16.mxu0 0
    %536 = vmatpush1.bf16.msra.mxu0 0
    %537 = vmatprep.subr.bf16.mxu0 0
    %538 = vmatpush1.bf16.msra.mxu0 0
    %539 = vmatprep.subr.bf16.mxu0 0
    %540 = vmatpush1.bf16.msra.mxu0 0
    %541 = vmatprep.subr.bf16.mxu0 0
    %542 = vmatpush1.bf16.msra.mxu0 0
    %543 = vmatprep.subr.bf16.mxu0 0
    %544 = vmatpush1.bf16.msra.mxu0 0
    %545 = vmatprep.subr.bf16.mxu0 0
    %546 = vmatpush1.bf16.msra.mxu0 0
    %547 = vmatprep.subr.bf16.mxu0 0
    %548 = vmatpush1.bf16.msra.mxu0 0
    %549 = vmatprep.subr.bf16.mxu0 0
    %550 = vmatpush1.bf16.msra.mxu0 0
    %551 = vmatprep.subr.bf16.mxu0 0
    %552 = vmatpush1.bf16.msra.mxu0 0
    %553 = vmatprep.subr.bf16.mxu0 0
    %554 = vmatpush1.bf16.msra.mxu0 0
    %555 = vmatprep.subr.bf16.mxu0 0
    %556 = vmatpush1.bf16.msra.mxu0 0
    %557 = vmatprep.subr.bf16.mxu0 0
    %558 = vmatpush1.bf16.msra.mxu0 0
    %559 = vmatprep.subr.bf16.mxu0 0
    %560 = vmatpush1.bf16.msra.mxu0 0
    %561 = vmatprep.mubr.bf16.mxu0 0
    %562 = vmatmul.mubr.bf16.gmra.mrb[0].mxu0 %v58
    %v563 = vpop.f32.mrb[0].mxu0
    %v564 = vadd.f32 0.0, %v563
    %v565 = vpop.f32.mrb[0].mxu0
    %v566 = vadd.f32 0.0, %v565
    %v567 = vpop.f32.mrb[0].mxu0
    %v568 = vpop.f32.mrb[0].mxu0
    %569 = vdwg.mxu0
    %v570 = vsel %vm108, %v564, 0.0
    %v571 = vsel %vm110, %v566, 0.0
    %v572 = vadd.f32 %v570, %v571
    %573 = vadd.xlane.f32.xlu0 %v572
    %v574 = vpop.xlane.xlu0 %573
    %v575 = vadd.f32 %v483, %v574
    %v576 = vmul.f32 %v564, %v564
    %v577 = vmul.f32 %v566, %v566
    %v578 = vsel %vm108, %v576, 0.0
    %v579 = vsel %vm110, %v577, 0.0
    %v580 = vadd.f32 %v578, %v579
    %581 = vadd.xlane.f32.xlu0 %v580
    %v582 = vpop.xlane.xlu0 %581
    %v583 = vadd.f32 %v491, %v582
    %s584 = scalar_lea.vmem %s0, 240
    %v585 = vld [vmem:[%s584] sm:$0xff]
    %v586 = vld [vmem:[%s584 + $0x8] sm:$0xff]
    %v587 = vld [vmem:[%s584 + $0x10] sm:$0xff]
    %v588 = vld [vmem:[%s584 + $0x18] sm:$0xff]
    %v589 = vld [vmem:[%s584 + $0x20] sm:$0x33]
    %v595 = vunpack.c.l.b16 %v585
    %v596 = vunpack.c.h.b16 %v585
    %v597 = vunpack.c.l.b16 %v586
    %v598 = vunpack.c.h.b16 %v586
    %v599 = vunpack.c.l.b16 %v587
    %v600 = vunpack.c.h.b16 %v587
    %v601 = vunpack.c.l.b16 %v588
    %v602 = vunpack.c.h.b16 %v588
    %v603 = vunpack.c.l.b16 %v589
    %v604 = vunpack.c.h.b16 %v589
    %v605 = vpack.c.b16 %v597, %v595
    %v606 = vpack.c.b16 %v598, %v596
    %v607 = vpack.c.b16 %v601, %v599
    %v608 = vpack.c.b16 %v602, %v600
    %v609 = vpack.c.b16 %v603, %v603
    %v610 = vpack.c.b16 %v604, %v604
    %v616 = vsel %vm60, %v609, 0
    %v619 = vsel %vm60, %v610, 0
    %621 = vmatprep.subr.bf16.mxu0 %v606
    %622 = vmatpush1.bf16.msra.mxu0 %v605
    %623 = vmatprep.subr.bf16.mxu0 %v608
    %624 = vmatpush1.bf16.msra.mxu0 %v607
    %625 = vmatprep.subr.bf16.mxu0 %v619
    %626 = vmatpush1.bf16.msra.mxu0 %v616
    %627 = vmatprep.subr.bf16.mxu0 0
    %628 = vmatpush1.bf16.msra.mxu0 0
    %629 = vmatprep.subr.bf16.mxu0 0
    %630 = vmatpush1.bf16.msra.mxu0 0
    %631 = vmatprep.subr.bf16.mxu0 0
    %632 = vmatpush1.bf16.msra.mxu0 0
    %633 = vmatprep.subr.bf16.mxu0 0
    %634 = vmatpush1.bf16.msra.mxu0 0
    %635 = vmatprep.subr.bf16.mxu0 0
    %636 = vmatpush1.bf16.msra.mxu0 0
    %637 = vmatprep.subr.bf16.mxu0 0
    %638 = vmatpush1.bf16.msra.mxu0 0
    %639 = vmatprep.subr.bf16.mxu0 0
    %640 = vmatpush1.bf16.msra.mxu0 0
    %641 = vmatprep.subr.bf16.mxu0 0
    %642 = vmatpush1.bf16.msra.mxu0 0
    %643 = vmatprep.subr.bf16.mxu0 0
    %644 = vmatpush1.bf16.msra.mxu0 0
    %645 = vmatprep.subr.bf16.mxu0 0
    %646 = vmatpush1.bf16.msra.mxu0 0
    %647 = vmatprep.subr.bf16.mxu0 0
    %648 = vmatpush1.bf16.msra.mxu0 0
    %649 = vmatprep.subr.bf16.mxu0 0
    %650 = vmatpush1.bf16.msra.mxu0 0
    %651 = vmatprep.subr.bf16.mxu0 0
    %652 = vmatpush1.bf16.msra.mxu0 0
    %653 = vmatprep.mubr.bf16.mxu0 0
    %654 = vmatmul.mubr.bf16.gmra.mrb[0].mxu0 %v58
    %v655 = vpop.f32.mrb[0].mxu0
    %v656 = vadd.f32 0.0, %v655
    %v657 = vpop.f32.mrb[0].mxu0
    %v658 = vadd.f32 0.0, %v657
    %v659 = vpop.f32.mrb[0].mxu0
    %v660 = vpop.f32.mrb[0].mxu0
    %661 = vdwg.mxu0
    %v662 = vsel %vm108, %v656, 0.0
    %v663 = vsel %vm110, %v658, 0.0
    %v664 = vadd.f32 %v662, %v663
    %665 = vadd.xlane.f32.xlu0 %v664
    %v666 = vpop.xlane.xlu0 %665
    %v667 = vadd.f32 %v575, %v666
    %v668 = vmul.f32 %v656, %v656
    %v669 = vmul.f32 %v658, %v658
    %v670 = vsel %vm108, %v668, 0.0
    %v671 = vsel %vm110, %v669, 0.0
    %v672 = vadd.f32 %v670, %v671
    %673 = vadd.xlane.f32.xlu0 %v672
    %v674 = vpop.xlane.xlu0 %673
    %v675 = vadd.f32 %v583, %v674
    %s676 = scalar_lea.vmem %s0, 280
    %v677 = vld [vmem:[%s676] sm:$0xff]
    %v678 = vld [vmem:[%s676 + $0x8] sm:$0xff]
    %v679 = vld [vmem:[%s676 + $0x10] sm:$0xff]
    %v680 = vld [vmem:[%s676 + $0x18] sm:$0xff]
    %v681 = vld [vmem:[%s676 + $0x20] sm:$0x33]
    %v687 = vunpack.c.l.b16 %v677
    %v688 = vunpack.c.h.b16 %v677
    %v689 = vunpack.c.l.b16 %v678
    %v690 = vunpack.c.h.b16 %v678
    %v691 = vunpack.c.l.b16 %v679
    %v692 = vunpack.c.h.b16 %v679
    %v693 = vunpack.c.l.b16 %v680
    %v694 = vunpack.c.h.b16 %v680
    %v695 = vunpack.c.l.b16 %v681
    %v696 = vunpack.c.h.b16 %v681
    %v697 = vpack.c.b16 %v689, %v687
    %v698 = vpack.c.b16 %v690, %v688
    %v699 = vpack.c.b16 %v693, %v691
    %v700 = vpack.c.b16 %v694, %v692
    %v701 = vpack.c.b16 %v695, %v695
    %v702 = vpack.c.b16 %v696, %v696
    %v708 = vsel %vm60, %v701, 0
    %v711 = vsel %vm60, %v702, 0
    %713 = vmatprep.subr.bf16.mxu0 %v698
    %714 = vmatpush1.bf16.msra.mxu0 %v697
    %715 = vmatprep.subr.bf16.mxu0 %v700
    %716 = vmatpush1.bf16.msra.mxu0 %v699
    %717 = vmatprep.subr.bf16.mxu0 %v711
    %718 = vmatpush1.bf16.msra.mxu0 %v708
    %719 = vmatprep.subr.bf16.mxu0 0
    %720 = vmatpush1.bf16.msra.mxu0 0
    %721 = vmatprep.subr.bf16.mxu0 0
    %722 = vmatpush1.bf16.msra.mxu0 0
    %723 = vmatprep.subr.bf16.mxu0 0
    %724 = vmatpush1.bf16.msra.mxu0 0
    %725 = vmatprep.subr.bf16.mxu0 0
    %726 = vmatpush1.bf16.msra.mxu0 0
    %727 = vmatprep.subr.bf16.mxu0 0
    %728 = vmatpush1.bf16.msra.mxu0 0
    %729 = vmatprep.subr.bf16.mxu0 0
    %730 = vmatpush1.bf16.msra.mxu0 0
    %731 = vmatprep.subr.bf16.mxu0 0
    %732 = vmatpush1.bf16.msra.mxu0 0
    %733 = vmatprep.subr.bf16.mxu0 0
    %734 = vmatpush1.bf16.msra.mxu0 0
    %735 = vmatprep.subr.bf16.mxu0 0
    %736 = vmatpush1.bf16.msra.mxu0 0
    %737 = vmatprep.subr.bf16.mxu0 0
    %738 = vmatpush1.bf16.msra.mxu0 0
    %739 = vmatprep.subr.bf16.mxu0 0
    %740 = vmatpush1.bf16.msra.mxu0 0
    %741 = vmatprep.subr.bf16.mxu0 0
    %742 = vmatpush1.bf16.msra.mxu0 0
    %743 = vmatprep.subr.bf16.mxu0 0
    %744 = vmatpush1.bf16.msra.mxu0 0
    %745 = vmatprep.mubr.bf16.mxu0 0
    %746 = vmatmul.mubr.bf16.gmra.mrb[0].mxu0 %v58
    %v747 = vpop.f32.mrb[0].mxu0
    %v748 = vadd.f32 0.0, %v747
    %v749 = vpop.f32.mrb[0].mxu0
    %v750 = vadd.f32 0.0, %v749
    %v751 = vpop.f32.mrb[0].mxu0
    %v752 = vpop.f32.mrb[0].mxu0
    %753 = vdwg.mxu0
    %v754 = vsel %vm108, %v748, 0.0
    %v755 = vsel %vm110, %v750, 0.0
    %v756 = vadd.f32 %v754, %v755
    %757 = vadd.xlane.f32.xlu0 %v756
    %v758 = vpop.xlane.xlu0 %757
    %v759 = vadd.f32 %v667, %v758
    %v760 = vmul.f32 %v748, %v748
    %v761 = vmul.f32 %v750, %v750
    %v762 = vsel %vm108, %v760, 0.0
    %v763 = vsel %vm110, %v761, 0.0
    %v764 = vadd.f32 %v762, %v763
    %765 = vadd.xlane.f32.xlu0 %v764
    %v766 = vpop.xlane.xlu0 %765
    %v767 = vadd.f32 %v675, %v766
    %v768 = vmul.f32 %v759, 0.0008116883
    %v769 = vmul.f32 %v767, 0.0008116883
    %v770 = vmul.f32 %v768, %v768
    %v771 = vsub.f32 %v769, %v770
    %v772 = vld [vmem:[%s2] sm:$0x3f]
    %v773 = vadd.f32 %v771, 1e-05
    %v774 = vrsqrt.pop %v773
    %v775 = vmul.f32 %v772, %v774
    %v776 = vld [vmem:[%s3] sm:$0x3f]
    %v777 = vmul.f32 %v768, %v775
    %v778 = vsub.f32 %v776, %v777
    %780 = vset.pattern.permute.xlu0 0
    %781 = vperm.xlu0 %780, %v775
    %v782 = vpop.permute.xlu0 %781
    %v784 = vmul.f32 %v102, %v782
    %v785 = vmul.f32 %v104, %v782
    %787 = vset.pattern.permute.xlu0 0
    %788 = vperm.xlu0 %787, %v778
    %v789 = vpop.permute.xlu0 %788
    %v791 = vadd.f32 %v784, %v789
    %v792 = vadd.f32 %v785, %v789
    %v793 = vmax.f32 %v791, 0.0
    %v794 = vmax.f32 %v792, 0.0
    %v795 = vmul.f32 %v288, %v782
    %v796 = vmul.f32 %v290, %v782
    %v797 = vadd.f32 %v795, %v789
    %v798 = vadd.f32 %v796, %v789
    %v799 = vmax.f32 %v797, 0.0
    %v800 = vmax.f32 %v798, 0.0
    %v801 = vmax.f32 %v793, %v799
    %v802 = vmax.f32 %v794, %v800
    %v803 = vmul.f32 %v472, %v782
    %v804 = vmul.f32 %v474, %v782
    %v805 = vadd.f32 %v803, %v789
    %v806 = vadd.f32 %v804, %v789
    %v807 = vmax.f32 %v805, 0.0
    %v808 = vmax.f32 %v806, 0.0
    %v809 = vmax.f32 %v801, %v807
    %v810 = vmax.f32 %v802, %v808
    %v811 = vmul.f32 %v656, %v782
    %v812 = vmul.f32 %v658, %v782
    %v813 = vadd.f32 %v811, %v789
    %v814 = vadd.f32 %v812, %v789
    %v815 = vmax.f32 %v813, 0.0
    %v816 = vmax.f32 %v814, 0.0
    %v817 = vmax.f32 %v809, %v815
    %v818 = vmax.f32 %v810, %v816
    %v819 = vld [vmem:[%s4] sm:$0xff]
    %v820 = vld [vmem:[%s4 + $0x8] sm:$0xff]
    %v821 = vld [vmem:[%s4 + $0x10] sm:$0xff]
    %v822 = vld [vmem:[%s4 + $0x18] sm:$0xff]
    %v823 = vld [vmem:[%s4 + $0x20] sm:$0xff]
    %v824 = vld [vmem:[%s4 + $0x28] sm:$0xff]
    %v825 = vld [vmem:[%s4 + $0x30] sm:$0xff]
    %v826 = vld [vmem:[%s4 + $0x38] sm:$0xff]
    %v827 = vld [vmem:[%s4 + $0x40] sm:$0xff]
    %v828 = vld [vmem:[%s4 + $0x48] sm:$0xff]
    %v829 = vld [vmem:[%s4 + $0x50] sm:$0xff]
    %v830 = vld [vmem:[%s4 + $0x58] sm:$0xff]
    %v831 = vld [vmem:[%s4 + $0x60] sm:$0xff]
    %v832 = vld [vmem:[%s4 + $0x68] sm:$0xff]
    %v833 = vld [vmem:[%s4 + $0x70] sm:$0xff]
    %v834 = vld [vmem:[%s4 + $0x78] sm:$0xff]
    %v835 = vld [vmem:[%s4 + $0x80] sm:$0xff]
    %v836 = vld [vmem:[%s4 + $0x88] sm:$0xff]
    %v837 = vld [vmem:[%s4 + $0x90] sm:$0xff]
    %v838 = vld [vmem:[%s4 + $0x98] sm:$0x3]
    %s839 = scalar_lea.vmem %s4, 160
    %v840 = vld [vmem:[%s839] sm:$0xff]
    %v841 = vld [vmem:[%s839 + $0x8] sm:$0xff]
    %v842 = vld [vmem:[%s839 + $0x10] sm:$0xff]
    %v843 = vld [vmem:[%s839 + $0x18] sm:$0xff]
    %v844 = vld [vmem:[%s839 + $0x20] sm:$0xff]
    %v845 = vld [vmem:[%s839 + $0x28] sm:$0xff]
    %v846 = vld [vmem:[%s839 + $0x30] sm:$0xff]
    %v847 = vld [vmem:[%s839 + $0x38] sm:$0xff]
    %v848 = vld [vmem:[%s839 + $0x40] sm:$0xff]
    %v849 = vld [vmem:[%s839 + $0x48] sm:$0xff]
    %v850 = vld [vmem:[%s839 + $0x50] sm:$0xff]
    %v851 = vld [vmem:[%s839 + $0x58] sm:$0xff]
    %v852 = vld [vmem:[%s839 + $0x60] sm:$0xff]
    %v853 = vld [vmem:[%s839 + $0x68] sm:$0xff]
    %v854 = vld [vmem:[%s839 + $0x70] sm:$0xff]
    %v855 = vld [vmem:[%s839 + $0x78] sm:$0xff]
    %v856 = vld [vmem:[%s839 + $0x80] sm:$0xff]
    %v857 = vld [vmem:[%s839 + $0x88] sm:$0xff]
    %v858 = vld [vmem:[%s839 + $0x90] sm:$0xff]
    %v859 = vld [vmem:[%s839 + $0x98] sm:$0x3]
    %v862 = vrot.slane %v817, 1
    %v863 = vrot.slane %v818, 1
    %vm865 = vcmask 211968
    %v866 = vsel %vm865, %v863, 0
    %v869 = vsel %vm60, %v859, 0
    %871 = vmatprep.subr.mxu0 0.0
    %872 = vmatpush1.msra.mxu0 %v840
    %873 = vmatprep.subr.mxu0 0.0
    %874 = vmatpush1.msra.mxu0 %v841
    %875 = vmatprep.subr.mxu0 0.0
    %876 = vmatpush1.msra.mxu0 %v842
    %877 = vmatprep.subr.mxu0 0.0
    %878 = vmatpush1.msra.mxu0 %v843
    %879 = vmatprep.subr.mxu0 0.0
    %880 = vmatpush1.msra.mxu0 %v844
    %881 = vmatprep.subr.mxu0 0.0
    %882 = vmatpush1.msra.mxu0 %v845
    %883 = vmatprep.subr.mxu0 0.0
    %884 = vmatpush1.msra.mxu0 %v846
    %885 = vmatprep.subr.mxu0 0.0
    %886 = vmatpush1.msra.mxu0 %v847
    %887 = vmatprep.subr.mxu0 0.0
    %888 = vmatpush1.msra.mxu0 %v848
    %889 = vmatprep.subr.mxu0 0.0
    %890 = vmatpush1.msra.mxu0 %v849
    %891 = vmatprep.subr.mxu0 0.0
    %892 = vmatpush1.msra.mxu0 %v850
    %893 = vmatprep.subr.mxu0 0.0
    %894 = vmatpush1.msra.mxu0 %v851
    %895 = vmatprep.subr.mxu0 0.0
    %896 = vmatpush1.msra.mxu0 %v852
    %897 = vmatprep.subr.mxu0 0.0
    %898 = vmatpush1.msra.mxu0 %v853
    %899 = vmatprep.subr.mxu0 0.0
    %900 = vmatpush1.msra.mxu0 %v854
    %901 = vmatprep.subr.mxu0 0.0
    %902 = vmatpush1.msra.mxu0 %v855
    %903 = vmatprep.subr.mxu0 0.0
    %904 = vmatpush1.msra.mxu0 %v856
    %905 = vmatprep.subr.mxu0 0.0
    %906 = vmatpush1.msra.mxu0 %v857
    %907 = vmatprep.subr.mxu0 0.0
    %908 = vmatpush1.msra.mxu0 %v858
    %909 = vmatprep.subr.mxu0 0.0
    %910 = vmatpush1.msra.mxu0 %v869
    %911 = vmatprep.subr.mxu0 0.0
    %912 = vmatpush1.msra.mxu0 0.0
    %913 = vmatprep.subr.mxu0 0.0
    %914 = vmatpush1.msra.mxu0 0.0
    %915 = vmatprep.subr.mxu0 0.0
    %916 = vmatpush1.msra.mxu0 0.0
    %917 = vmatprep.subr.mxu0 0.0
    %918 = vmatpush1.msra.mxu0 0.0
    %919 = vmatprep.subr.mxu0 0.0
    %920 = vmatpush1.msra.mxu0 0.0
    %921 = vmatprep.subr.mxu0 0.0
    %922 = vmatpush1.msra.mxu0 0.0
    %923 = vmatprep.subr.mxu0 0.0
    %924 = vmatpush1.msra.mxu0 0.0
    %925 = vmatprep.subr.mxu0 0.0
    %926 = vmatpush1.msra.mxu0 0.0
    %927 = vmatprep.subr.mxu0 0.0
    %928 = vmatpush1.msra.mxu0 0.0
    %929 = vmatprep.subr.mxu0 0.0
    %930 = vmatpush1.msra.mxu0 0.0
    %931 = vmatprep.subr.mxu0 0.0
    %932 = vmatpush1.msra.mxu0 0.0
    %933 = vmatprep.subr.mxu0 0.0
    %934 = vmatpush1.msra.mxu0 0.0
    %935 = vmatprep.mubr.f32.mxu0 %v866
    %936 = vmatmul.mubr.f32.gmra.mrb[0].mxu0 %v862
    %v937 = vpop.f32.mrb[0].mxu0
    %v938 = vadd.f32 0.0, %v937
    %v939 = vpop.f32.mrb[0].mxu0
    %940 = vdwg.mxu0
    %v941 = vsel %vm865, %v818, 0
    %v944 = vsel %vm60, %v838, 0
    %946 = vmatprep.subr.mxu0 0.0
    %947 = vmatpush1.msra.mxu0 %v819
    %948 = vmatprep.subr.mxu0 0.0
    %949 = vmatpush1.msra.mxu0 %v820
    %950 = vmatprep.subr.mxu0 0.0
    %951 = vmatpush1.msra.mxu0 %v821
    %952 = vmatprep.subr.mxu0 0.0
    %953 = vmatpush1.msra.mxu0 %v822
    %954 = vmatprep.subr.mxu0 0.0
    %955 = vmatpush1.msra.mxu0 %v823
    %956 = vmatprep.subr.mxu0 0.0
    %957 = vmatpush1.msra.mxu0 %v824
    %958 = vmatprep.subr.mxu0 0.0
    %959 = vmatpush1.msra.mxu0 %v825
    %960 = vmatprep.subr.mxu0 0.0
    %961 = vmatpush1.msra.mxu0 %v826
    %962 = vmatprep.subr.mxu0 0.0
    %963 = vmatpush1.msra.mxu0 %v827
    %964 = vmatprep.subr.mxu0 0.0
    %965 = vmatpush1.msra.mxu0 %v828
    %966 = vmatprep.subr.mxu0 0.0
    %967 = vmatpush1.msra.mxu0 %v829
    %968 = vmatprep.subr.mxu0 0.0
    %969 = vmatpush1.msra.mxu0 %v830
    %970 = vmatprep.subr.mxu0 0.0
    %971 = vmatpush1.msra.mxu0 %v831
    %972 = vmatprep.subr.mxu0 0.0
    %973 = vmatpush1.msra.mxu0 %v832
    %974 = vmatprep.subr.mxu0 0.0
    %975 = vmatpush1.msra.mxu0 %v833
    %976 = vmatprep.subr.mxu0 0.0
    %977 = vmatpush1.msra.mxu0 %v834
    %978 = vmatprep.subr.mxu0 0.0
    %979 = vmatpush1.msra.mxu0 %v835
    %980 = vmatprep.subr.mxu0 0.0
    %981 = vmatpush1.msra.mxu0 %v836
    %982 = vmatprep.subr.mxu0 0.0
    %983 = vmatpush1.msra.mxu0 %v837
    %984 = vmatprep.subr.mxu0 0.0
    %985 = vmatpush1.msra.mxu0 %v944
    %986 = vmatprep.subr.mxu0 0.0
    %987 = vmatpush1.msra.mxu0 0.0
    %988 = vmatprep.subr.mxu0 0.0
    %989 = vmatpush1.msra.mxu0 0.0
    %990 = vmatprep.subr.mxu0 0.0
    %991 = vmatpush1.msra.mxu0 0.0
    %992 = vmatprep.subr.mxu0 0.0
    %993 = vmatpush1.msra.mxu0 0.0
    %994 = vmatprep.subr.mxu0 0.0
    %995 = vmatpush1.msra.mxu0 0.0
    %996 = vmatprep.subr.mxu0 0.0
    %997 = vmatpush1.msra.mxu0 0.0
    %998 = vmatprep.subr.mxu0 0.0
    %999 = vmatpush1.msra.mxu0 0.0
    %1000 = vmatprep.subr.mxu0 0.0
    %1001 = vmatpush1.msra.mxu0 0.0
    %1002 = vmatprep.subr.mxu0 0.0
    %1003 = vmatpush1.msra.mxu0 0.0
    %1004 = vmatprep.subr.mxu0 0.0
    %1005 = vmatpush1.msra.mxu0 0.0
    %1006 = vmatprep.subr.mxu0 0.0
    %1007 = vmatpush1.msra.mxu0 0.0
    %1008 = vmatprep.subr.mxu0 0.0
    %1009 = vmatpush1.msra.mxu0 0.0
    %1010 = vmatprep.mubr.f32.mxu0 %v941
    %1011 = vmatmul.mubr.f32.gmra.mrb[0].mxu0 %v817
    %v1012 = vpop.f32.mrb[0].mxu0
    %v1013 = vadd.f32 %v938, %v1012
    %v1014 = vpop.f32.mrb[0].mxu0
    %1015 = vdwg.mxu0
    %s1016 = scalar_lea.vmem %s4, 320
    %v1017 = vld [vmem:[%s1016] sm:$0xff]
    %v1018 = vld [vmem:[%s1016 + $0x8] sm:$0xff]
    %v1019 = vld [vmem:[%s1016 + $0x10] sm:$0xff]
    %v1020 = vld [vmem:[%s1016 + $0x18] sm:$0xff]
    %v1021 = vld [vmem:[%s1016 + $0x20] sm:$0xff]
    %v1022 = vld [vmem:[%s1016 + $0x28] sm:$0xff]
    %v1023 = vld [vmem:[%s1016 + $0x30] sm:$0xff]
    %v1024 = vld [vmem:[%s1016 + $0x38] sm:$0xff]
    %v1025 = vld [vmem:[%s1016 + $0x40] sm:$0xff]
    %v1026 = vld [vmem:[%s1016 + $0x48] sm:$0xff]
    %v1027 = vld [vmem:[%s1016 + $0x50] sm:$0xff]
    %v1028 = vld [vmem:[%s1016 + $0x58] sm:$0xff]
    %v1029 = vld [vmem:[%s1016 + $0x60] sm:$0xff]
    %v1030 = vld [vmem:[%s1016 + $0x68] sm:$0xff]
    %v1031 = vld [vmem:[%s1016 + $0x70] sm:$0xff]
    %v1032 = vld [vmem:[%s1016 + $0x78] sm:$0xff]
    %v1033 = vld [vmem:[%s1016 + $0x80] sm:$0xff]
    %v1034 = vld [vmem:[%s1016 + $0x88] sm:$0xff]
    %v1035 = vld [vmem:[%s1016 + $0x90] sm:$0xff]
    %v1036 = vld [vmem:[%s1016 + $0x98] sm:$0x3]
    %v1037 = vrot.slane %v817, 2
    %v1038 = vrot.slane %v818, 2
    %v1040 = vsel %vm865, %v1038, 0
    %v1043 = vsel %vm60, %v1036, 0
    %1045 = vmatprep.subr.mxu0 0.0
    %1046 = vmatpush1.msra.mxu0 %v1017
    %1047 = vmatprep.subr.mxu0 0.0
    %1048 = vmatpush1.msra.mxu0 %v1018
    %1049 = vmatprep.subr.mxu0 0.0
    %1050 = vmatpush1.msra.mxu0 %v1019
    %1051 = vmatprep.subr.mxu0 0.0
    %1052 = vmatpush1.msra.mxu0 %v1020
    %1053 = vmatprep.subr.mxu0 0.0
    %1054 = vmatpush1.msra.mxu0 %v1021
    %1055 = vmatprep.subr.mxu0 0.0
    %1056 = vmatpush1.msra.mxu0 %v1022
    %1057 = vmatprep.subr.mxu0 0.0
    %1058 = vmatpush1.msra.mxu0 %v1023
    %1059 = vmatprep.subr.mxu0 0.0
    %1060 = vmatpush1.msra.mxu0 %v1024
    %1061 = vmatprep.subr.mxu0 0.0
    %1062 = vmatpush1.msra.mxu0 %v1025
    %1063 = vmatprep.subr.mxu0 0.0
    %1064 = vmatpush1.msra.mxu0 %v1026
    %1065 = vmatprep.subr.mxu0 0.0
    %1066 = vmatpush1.msra.mxu0 %v1027
    %1067 = vmatprep.subr.mxu0 0.0
    %1068 = vmatpush1.msra.mxu0 %v1028
    %1069 = vmatprep.subr.mxu0 0.0
    %1070 = vmatpush1.msra.mxu0 %v1029
    %1071 = vmatprep.subr.mxu0 0.0
    %1072 = vmatpush1.msra.mxu0 %v1030
    %1073 = vmatprep.subr.mxu0 0.0
    %1074 = vmatpush1.msra.mxu0 %v1031
    %1075 = vmatprep.subr.mxu0 0.0
    %1076 = vmatpush1.msra.mxu0 %v1032
    %1077 = vmatprep.subr.mxu0 0.0
    %1078 = vmatpush1.msra.mxu0 %v1033
    %1079 = vmatprep.subr.mxu0 0.0
    %1080 = vmatpush1.msra.mxu0 %v1034
    %1081 = vmatprep.subr.mxu0 0.0
    %1082 = vmatpush1.msra.mxu0 %v1035
    %1083 = vmatprep.subr.mxu0 0.0
    %1084 = vmatpush1.msra.mxu0 %v1043
    %1085 = vmatprep.subr.mxu0 0.0
    %1086 = vmatpush1.msra.mxu0 0.0
    %1087 = vmatprep.subr.mxu0 0.0
    %1088 = vmatpush1.msra.mxu0 0.0
    %1089 = vmatprep.subr.mxu0 0.0
    %1090 = vmatpush1.msra.mxu0 0.0
    %1091 = vmatprep.subr.mxu0 0.0
    %1092 = vmatpush1.msra.mxu0 0.0
    %1093 = vmatprep.subr.mxu0 0.0
    %1094 = vmatpush1.msra.mxu0 0.0
    %1095 = vmatprep.subr.mxu0 0.0
    %1096 = vmatpush1.msra.mxu0 0.0
    %1097 = vmatprep.subr.mxu0 0.0
    %1098 = vmatpush1.msra.mxu0 0.0
    %1099 = vmatprep.subr.mxu0 0.0
    %1100 = vmatpush1.msra.mxu0 0.0
    %1101 = vmatprep.subr.mxu0 0.0
    %1102 = vmatpush1.msra.mxu0 0.0
    %1103 = vmatprep.subr.mxu0 0.0
    %1104 = vmatpush1.msra.mxu0 0.0
    %1105 = vmatprep.subr.mxu0 0.0
    %1106 = vmatpush1.msra.mxu0 0.0
    %1107 = vmatprep.subr.mxu0 0.0
    %1108 = vmatpush1.msra.mxu0 0.0
    %1109 = vmatprep.mubr.f32.mxu0 %v1040
    %1110 = vmatmul.mubr.f32.gmra.mrb[0].mxu0 %v1037
    %v1111 = vpop.f32.mrb[0].mxu0
    %v1112 = vadd.f32 0.0, %v1111
    %v1113 = vpop.f32.mrb[0].mxu0
    %1114 = vdwg.mxu0
    %v1115 = vadd.f32 %v1013, %v1112
    %s1116 = scalar_lea.vmem %s4, 480
    %v1117 = vld [vmem:[%s1116] sm:$0xff]
    %v1118 = vld [vmem:[%s1116 + $0x8] sm:$0xff]
    %v1119 = vld [vmem:[%s1116 + $0x10] sm:$0xff]
    %v1120 = vld [vmem:[%s1116 + $0x18] sm:$0xff]
    %v1121 = vld [vmem:[%s1116 + $0x20] sm:$0xff]
    %v1122 = vld [vmem:[%s1116 + $0x28] sm:$0xff]
    %v1123 = vld [vmem:[%s1116 + $0x30] sm:$0xff]
    %v1124 = vld [vmem:[%s1116 + $0x38] sm:$0xff]
    %v1125 = vld [vmem:[%s1116 + $0x40] sm:$0xff]
    %v1126 = vld [vmem:[%s1116 + $0x48] sm:$0xff]
    %v1127 = vld [vmem:[%s1116 + $0x50] sm:$0xff]
    %v1128 = vld [vmem:[%s1116 + $0x58] sm:$0xff]
    %v1129 = vld [vmem:[%s1116 + $0x60] sm:$0xff]
    %v1130 = vld [vmem:[%s1116 + $0x68] sm:$0xff]
    %v1131 = vld [vmem:[%s1116 + $0x70] sm:$0xff]
    %v1132 = vld [vmem:[%s1116 + $0x78] sm:$0xff]
    %v1133 = vld [vmem:[%s1116 + $0x80] sm:$0xff]
    %v1134 = vld [vmem:[%s1116 + $0x88] sm:$0xff]
    %v1135 = vld [vmem:[%s1116 + $0x90] sm:$0xff]
    %v1136 = vld [vmem:[%s1116 + $0x98] sm:$0x3]
    %v1137 = vrot.slane %v817, 3
    %v1138 = vrot.slane %v818, 3
    %v1140 = vsel %vm865, %v1138, 0
    %v1143 = vsel %vm60, %v1136, 0
    %1145 = vmatprep.subr.mxu0 0.0
    %1146 = vmatpush1.msra.mxu0 %v1117
    %1147 = vmatprep.subr.mxu0 0.0
    %1148 = vmatpush1.msra.mxu0 %v1118
    %1149 = vmatprep.subr.mxu0 0.0
    %1150 = vmatpush1.msra.mxu0 %v1119
    %1151 = vmatprep.subr.mxu0 0.0
    %1152 = vmatpush1.msra.mxu0 %v1120
    %1153 = vmatprep.subr.mxu0 0.0
    %1154 = vmatpush1.msra.mxu0 %v1121
    %1155 = vmatprep.subr.mxu0 0.0
    %1156 = vmatpush1.msra.mxu0 %v1122
    %1157 = vmatprep.subr.mxu0 0.0
    %1158 = vmatpush1.msra.mxu0 %v1123
    %1159 = vmatprep.subr.mxu0 0.0
    %1160 = vmatpush1.msra.mxu0 %v1124
    %1161 = vmatprep.subr.mxu0 0.0
    %1162 = vmatpush1.msra.mxu0 %v1125
    %1163 = vmatprep.subr.mxu0 0.0
    %1164 = vmatpush1.msra.mxu0 %v1126
    %1165 = vmatprep.subr.mxu0 0.0
    %1166 = vmatpush1.msra.mxu0 %v1127
    %1167 = vmatprep.subr.mxu0 0.0
    %1168 = vmatpush1.msra.mxu0 %v1128
    %1169 = vmatprep.subr.mxu0 0.0
    %1170 = vmatpush1.msra.mxu0 %v1129
    %1171 = vmatprep.subr.mxu0 0.0
    %1172 = vmatpush1.msra.mxu0 %v1130
    %1173 = vmatprep.subr.mxu0 0.0
    %1174 = vmatpush1.msra.mxu0 %v1131
    %1175 = vmatprep.subr.mxu0 0.0
    %1176 = vmatpush1.msra.mxu0 %v1132
    %1177 = vmatprep.subr.mxu0 0.0
    %1178 = vmatpush1.msra.mxu0 %v1133
    %1179 = vmatprep.subr.mxu0 0.0
    %1180 = vmatpush1.msra.mxu0 %v1134
    %1181 = vmatprep.subr.mxu0 0.0
    %1182 = vmatpush1.msra.mxu0 %v1135
    %1183 = vmatprep.subr.mxu0 0.0
    %1184 = vmatpush1.msra.mxu0 %v1143
    %1185 = vmatprep.subr.mxu0 0.0
    %1186 = vmatpush1.msra.mxu0 0.0
    %1187 = vmatprep.subr.mxu0 0.0
    %1188 = vmatpush1.msra.mxu0 0.0
    %1189 = vmatprep.subr.mxu0 0.0
    %1190 = vmatpush1.msra.mxu0 0.0
    %1191 = vmatprep.subr.mxu0 0.0
    %1192 = vmatpush1.msra.mxu0 0.0
    %1193 = vmatprep.subr.mxu0 0.0
    %1194 = vmatpush1.msra.mxu0 0.0
    %1195 = vmatprep.subr.mxu0 0.0
    %1196 = vmatpush1.msra.mxu0 0.0
    %1197 = vmatprep.subr.mxu0 0.0
    %1198 = vmatpush1.msra.mxu0 0.0
    %1199 = vmatprep.subr.mxu0 0.0
    %1200 = vmatpush1.msra.mxu0 0.0
    %1201 = vmatprep.subr.mxu0 0.0
    %1202 = vmatpush1.msra.mxu0 0.0
    %1203 = vmatprep.subr.mxu0 0.0
    %1204 = vmatpush1.msra.mxu0 0.0
    %1205 = vmatprep.subr.mxu0 0.0
    %1206 = vmatpush1.msra.mxu0 0.0
    %1207 = vmatprep.subr.mxu0 0.0
    %1208 = vmatpush1.msra.mxu0 0.0
    %1209 = vmatprep.mubr.f32.mxu0 %v1140
    %1210 = vmatmul.mubr.f32.gmra.mrb[0].mxu0 %v1137
    %v1211 = vpop.f32.mrb[0].mxu0
    %v1212 = vadd.f32 0.0, %v1211
    %v1213 = vpop.f32.mrb[0].mxu0
    %1214 = vdwg.mxu0
    %v1215 = vadd.f32 %v1115, %v1212
    %s1216 = scalar_lea.vmem %s4, 640
    %v1217 = vld [vmem:[%s1216] sm:$0xff]
    %v1218 = vld [vmem:[%s1216 + $0x8] sm:$0xff]
    %v1219 = vld [vmem:[%s1216 + $0x10] sm:$0xff]
    %v1220 = vld [vmem:[%s1216 + $0x18] sm:$0xff]
    %v1221 = vld [vmem:[%s1216 + $0x20] sm:$0xff]
    %v1222 = vld [vmem:[%s1216 + $0x28] sm:$0xff]
    %v1223 = vld [vmem:[%s1216 + $0x30] sm:$0xff]
    %v1224 = vld [vmem:[%s1216 + $0x38] sm:$0xff]
    %v1225 = vld [vmem:[%s1216 + $0x40] sm:$0xff]
    %v1226 = vld [vmem:[%s1216 + $0x48] sm:$0xff]
    %v1227 = vld [vmem:[%s1216 + $0x50] sm:$0xff]
    %v1228 = vld [vmem:[%s1216 + $0x58] sm:$0xff]
    %v1229 = vld [vmem:[%s1216 + $0x60] sm:$0xff]
    %v1230 = vld [vmem:[%s1216 + $0x68] sm:$0xff]
    %v1231 = vld [vmem:[%s1216 + $0x70] sm:$0xff]
    %v1232 = vld [vmem:[%s1216 + $0x78] sm:$0xff]
    %v1233 = vld [vmem:[%s1216 + $0x80] sm:$0xff]
    %v1234 = vld [vmem:[%s1216 + $0x88] sm:$0xff]
    %v1235 = vld [vmem:[%s1216 + $0x90] sm:$0xff]
    %v1236 = vld [vmem:[%s1216 + $0x98] sm:$0x3]
    %v1237 = vrot.slane %v817, 4
    %v1238 = vrot.slane %v818, 4
    %v1240 = vsel %vm865, %v1238, 0
    %v1243 = vsel %vm60, %v1236, 0
    %1245 = vmatprep.subr.mxu0 0.0
    %1246 = vmatpush1.msra.mxu0 %v1217
    %1247 = vmatprep.subr.mxu0 0.0
    %1248 = vmatpush1.msra.mxu0 %v1218
    %1249 = vmatprep.subr.mxu0 0.0
    %1250 = vmatpush1.msra.mxu0 %v1219
    %1251 = vmatprep.subr.mxu0 0.0
    %1252 = vmatpush1.msra.mxu0 %v1220
    %1253 = vmatprep.subr.mxu0 0.0
    %1254 = vmatpush1.msra.mxu0 %v1221
    %1255 = vmatprep.subr.mxu0 0.0
    %1256 = vmatpush1.msra.mxu0 %v1222
    %1257 = vmatprep.subr.mxu0 0.0
    %1258 = vmatpush1.msra.mxu0 %v1223
    %1259 = vmatprep.subr.mxu0 0.0
    %1260 = vmatpush1.msra.mxu0 %v1224
    %1261 = vmatprep.subr.mxu0 0.0
    %1262 = vmatpush1.msra.mxu0 %v1225
    %1263 = vmatprep.subr.mxu0 0.0
    %1264 = vmatpush1.msra.mxu0 %v1226
    %1265 = vmatprep.subr.mxu0 0.0
    %1266 = vmatpush1.msra.mxu0 %v1227
    %1267 = vmatprep.subr.mxu0 0.0
    %1268 = vmatpush1.msra.mxu0 %v1228
    %1269 = vmatprep.subr.mxu0 0.0
    %1270 = vmatpush1.msra.mxu0 %v1229
    %1271 = vmatprep.subr.mxu0 0.0
    %1272 = vmatpush1.msra.mxu0 %v1230
    %1273 = vmatprep.subr.mxu0 0.0
    %1274 = vmatpush1.msra.mxu0 %v1231
    %1275 = vmatprep.subr.mxu0 0.0
    %1276 = vmatpush1.msra.mxu0 %v1232
    %1277 = vmatprep.subr.mxu0 0.0
    %1278 = vmatpush1.msra.mxu0 %v1233
    %1279 = vmatprep.subr.mxu0 0.0
    %1280 = vmatpush1.msra.mxu0 %v1234
    %1281 = vmatprep.subr.mxu0 0.0
    %1282 = vmatpush1.msra.mxu0 %v1235
    %1283 = vmatprep.subr.mxu0 0.0
    %1284 = vmatpush1.msra.mxu0 %v1243
    %1285 = vmatprep.subr.mxu0 0.0
    %1286 = vmatpush1.msra.mxu0 0.0
    %1287 = vmatprep.subr.mxu0 0.0
    %1288 = vmatpush1.msra.mxu0 0.0
    %1289 = vmatprep.subr.mxu0 0.0
    %1290 = vmatpush1.msra.mxu0 0.0
    %1291 = vmatprep.subr.mxu0 0.0
    %1292 = vmatpush1.msra.mxu0 0.0
    %1293 = vmatprep.subr.mxu0 0.0
    %1294 = vmatpush1.msra.mxu0 0.0
    %1295 = vmatprep.subr.mxu0 0.0
    %1296 = vmatpush1.msra.mxu0 0.0
    %1297 = vmatprep.subr.mxu0 0.0
    %1298 = vmatpush1.msra.mxu0 0.0
    %1299 = vmatprep.subr.mxu0 0.0
    %1300 = vmatpush1.msra.mxu0 0.0
    %1301 = vmatprep.subr.mxu0 0.0
    %1302 = vmatpush1.msra.mxu0 0.0
    %1303 = vmatprep.subr.mxu0 0.0
    %1304 = vmatpush1.msra.mxu0 0.0
    %1305 = vmatprep.subr.mxu0 0.0
    %1306 = vmatpush1.msra.mxu0 0.0
    %1307 = vmatprep.subr.mxu0 0.0
    %1308 = vmatpush1.msra.mxu0 0.0
    %1309 = vmatprep.mubr.f32.mxu0 %v1240
    %1310 = vmatmul.mubr.f32.gmra.mrb[0].mxu0 %v1237
    %v1311 = vpop.f32.mrb[0].mxu0
    %v1312 = vadd.f32 0.0, %v1311
    %v1313 = vpop.f32.mrb[0].mxu0
    %1314 = vdwg.mxu0
    %v1315 = vadd.f32 %v1215, %v1312
    %s1316 = scalar_lea.vmem %s4, 800
    %v1317 = vld [vmem:[%s1316] sm:$0xff]
    %v1318 = vld [vmem:[%s1316 + $0x8] sm:$0xff]
    %v1319 = vld [vmem:[%s1316 + $0x10] sm:$0xff]
    %v1320 = vld [vmem:[%s1316 + $0x18] sm:$0xff]
    %v1321 = vld [vmem:[%s1316 + $0x20] sm:$0xff]
    %v1322 = vld [vmem:[%s1316 + $0x28] sm:$0xff]
    %v1323 = vld [vmem:[%s1316 + $0x30] sm:$0xff]
    %v1324 = vld [vmem:[%s1316 + $0x38] sm:$0xff]
    %v1325 = vld [vmem:[%s1316 + $0x40] sm:$0xff]
    %v1326 = vld [vmem:[%s1316 + $0x48] sm:$0xff]
    %v1327 = vld [vmem:[%s1316 + $0x50] sm:$0xff]
    %v1328 = vld [vmem:[%s1316 + $0x58] sm:$0xff]
    %v1329 = vld [vmem:[%s1316 + $0x60] sm:$0xff]
    %v1330 = vld [vmem:[%s1316 + $0x68] sm:$0xff]
    %v1331 = vld [vmem:[%s1316 + $0x70] sm:$0xff]
    %v1332 = vld [vmem:[%s1316 + $0x78] sm:$0xff]
    %v1333 = vld [vmem:[%s1316 + $0x80] sm:$0xff]
    %v1334 = vld [vmem:[%s1316 + $0x88] sm:$0xff]
    %v1335 = vld [vmem:[%s1316 + $0x90] sm:$0xff]
    %v1336 = vld [vmem:[%s1316 + $0x98] sm:$0x3]
    %v1337 = vrot.slane %v817, 5
    %v1338 = vrot.slane %v818, 5
    %v1340 = vsel %vm865, %v1338, 0
    %v1343 = vsel %vm60, %v1336, 0
    %1345 = vmatprep.subr.mxu0 0.0
    %1346 = vmatpush1.msra.mxu0 %v1317
    %1347 = vmatprep.subr.mxu0 0.0
    %1348 = vmatpush1.msra.mxu0 %v1318
    %1349 = vmatprep.subr.mxu0 0.0
    %1350 = vmatpush1.msra.mxu0 %v1319
    %1351 = vmatprep.subr.mxu0 0.0
    %1352 = vmatpush1.msra.mxu0 %v1320
    %1353 = vmatprep.subr.mxu0 0.0
    %1354 = vmatpush1.msra.mxu0 %v1321
    %1355 = vmatprep.subr.mxu0 0.0
    %1356 = vmatpush1.msra.mxu0 %v1322
    %1357 = vmatprep.subr.mxu0 0.0
    %1358 = vmatpush1.msra.mxu0 %v1323
    %1359 = vmatprep.subr.mxu0 0.0
    %1360 = vmatpush1.msra.mxu0 %v1324
    %1361 = vmatprep.subr.mxu0 0.0
    %1362 = vmatpush1.msra.mxu0 %v1325
    %1363 = vmatprep.subr.mxu0 0.0
    %1364 = vmatpush1.msra.mxu0 %v1326
    %1365 = vmatprep.subr.mxu0 0.0
    %1366 = vmatpush1.msra.mxu0 %v1327
    %1367 = vmatprep.subr.mxu0 0.0
    %1368 = vmatpush1.msra.mxu0 %v1328
    %1369 = vmatprep.subr.mxu0 0.0
    %1370 = vmatpush1.msra.mxu0 %v1329
    %1371 = vmatprep.subr.mxu0 0.0
    %1372 = vmatpush1.msra.mxu0 %v1330
    %1373 = vmatprep.subr.mxu0 0.0
    %1374 = vmatpush1.msra.mxu0 %v1331
    %1375 = vmatprep.subr.mxu0 0.0
    %1376 = vmatpush1.msra.mxu0 %v1332
    %1377 = vmatprep.subr.mxu0 0.0
    %1378 = vmatpush1.msra.mxu0 %v1333
    %1379 = vmatprep.subr.mxu0 0.0
    %1380 = vmatpush1.msra.mxu0 %v1334
    %1381 = vmatprep.subr.mxu0 0.0
    %1382 = vmatpush1.msra.mxu0 %v1335
    %1383 = vmatprep.subr.mxu0 0.0
    %1384 = vmatpush1.msra.mxu0 %v1343
    %1385 = vmatprep.subr.mxu0 0.0
    %1386 = vmatpush1.msra.mxu0 0.0
    %1387 = vmatprep.subr.mxu0 0.0
    %1388 = vmatpush1.msra.mxu0 0.0
    %1389 = vmatprep.subr.mxu0 0.0
    %1390 = vmatpush1.msra.mxu0 0.0
    %1391 = vmatprep.subr.mxu0 0.0
    %1392 = vmatpush1.msra.mxu0 0.0
    %1393 = vmatprep.subr.mxu0 0.0
    %1394 = vmatpush1.msra.mxu0 0.0
    %1395 = vmatprep.subr.mxu0 0.0
    %1396 = vmatpush1.msra.mxu0 0.0
    %1397 = vmatprep.subr.mxu0 0.0
    %1398 = vmatpush1.msra.mxu0 0.0
    %1399 = vmatprep.subr.mxu0 0.0
    %1400 = vmatpush1.msra.mxu0 0.0
    %1401 = vmatprep.subr.mxu0 0.0
    %1402 = vmatpush1.msra.mxu0 0.0
    %1403 = vmatprep.subr.mxu0 0.0
    %1404 = vmatpush1.msra.mxu0 0.0
    %1405 = vmatprep.subr.mxu0 0.0
    %1406 = vmatpush1.msra.mxu0 0.0
    %1407 = vmatprep.subr.mxu0 0.0
    %1408 = vmatpush1.msra.mxu0 0.0
    %1409 = vmatprep.mubr.f32.mxu0 %v1340
    %1410 = vmatmul.mubr.f32.gmra.mrb[0].mxu0 %v1337
    %v1411 = vpop.f32.mrb[0].mxu0
    %v1412 = vadd.f32 0.0, %v1411
    %v1413 = vpop.f32.mrb[0].mxu0
    %1414 = vdwg.mxu0
    %v1415 = vadd.f32 %v1315, %v1412
    %v1416 = vld [vmem:[%s5] sm:$0x1]
    %v1417 = vadd.f32 %v1415, %v1416
    %v1418 = vmax.f32 %v1417, 0.0
    %v1419 = vxor.u32 %v1418, 2147483648
    %v1420 = vmul.f32 %v1419, 1.442695
    %v1421 = vpow.pop %v1420
    %v1422 = vadd.f32 %v1421, 1.0
    %v1423 = vrcp.pop %v1422
    %v1424 = vmul.f32 1.0, %v1423
    %vm1425 = vcmask 32768
    %1426 = vst.msk [vmem:[#allocation2] sm:$0x1] %vm1425, %v1424
    %v1427 = vmul.f32 %v196, %v782
    %v1428 = vmul.f32 %v198, %v782
    %v1429 = vadd.f32 %v1427, %v789
    %v1430 = vadd.f32 %v1428, %v789
    %v1431 = vmax.f32 %v1429, 0.0
    %v1432 = vmax.f32 %v1430, 0.0
    %v1433 = vmul.f32 %v380, %v782
    %v1434 = vmul.f32 %v382, %v782
    %v1435 = vadd.f32 %v1433, %v789
    %v1436 = vadd.f32 %v1434, %v789
    %v1437 = vmax.f32 %v1435, 0.0
    %v1438 = vmax.f32 %v1436, 0.0
    %v1439 = vmax.f32 %v1431, %v1437
    %v1440 = vmax.f32 %v1432, %v1438
    %v1441 = vmul.f32 %v564, %v782
    %v1442 = vmul.f32 %v566, %v782
    %v1443 = vadd.f32 %v1441, %v789
    %v1444 = vadd.f32 %v1442, %v789
    %v1445 = vmax.f32 %v1443, 0.0
    %v1446 = vmax.f32 %v1444, 0.0
    %v1447 = vmax.f32 %v1439, %v1445
    %v1448 = vmax.f32 %v1440, %v1446
    %v1449 = vmul.f32 %v748, %v782
    %v1450 = vmul.f32 %v750, %v782
    %v1451 = vadd.f32 %v1449, %v789
    %v1452 = vadd.f32 %v1450, %v789
    %v1453 = vmax.f32 %v1451, 0.0
    %v1454 = vmax.f32 %v1452, 0.0
    %v1455 = vmax.f32 %v1447, %v1453
    %v1456 = vmax.f32 %v1448, %v1454
    %v1457 = vld [vmem:[%s4] sm:$0xff]
    %v1458 = vld [vmem:[%s4 + $0x8] sm:$0xff]
    %v1459 = vld [vmem:[%s4 + $0x10] sm:$0xff]
    %v1460 = vld [vmem:[%s4 + $0x18] sm:$0xff]
    %v1461 = vld [vmem:[%s4 + $0x20] sm:$0xff]
    %v1462 = vld [vmem:[%s4 + $0x28] sm:$0xff]
    %v1463 = vld [vmem:[%s4 + $0x30] sm:$0xff]
    %v1464 = vld [vmem:[%s4 + $0x38] sm:$0xff]
    %v1465 = vld [vmem:[%s4 + $0x40] sm:$0xff]
    %v1466 = vld [vmem:[%s4 + $0x48] sm:$0xff]
    %v1467 = vld [vmem:[%s4 + $0x50] sm:$0xff]
    %v1468 = vld [vmem:[%s4 + $0x58] sm:$0xff]
    %v1469 = vld [vmem:[%s4 + $0x60] sm:$0xff]
    %v1470 = vld [vmem:[%s4 + $0x68] sm:$0xff]
    %v1471 = vld [vmem:[%s4 + $0x70] sm:$0xff]
    %v1472 = vld [vmem:[%s4 + $0x78] sm:$0xff]
    %v1473 = vld [vmem:[%s4 + $0x80] sm:$0xff]
    %v1474 = vld [vmem:[%s4 + $0x88] sm:$0xff]
    %v1475 = vld [vmem:[%s4 + $0x90] sm:$0xff]
    %v1476 = vld [vmem:[%s4 + $0x98] sm:$0x3]
    %v1477 = vld [vmem:[%s839] sm:$0xff]
    %v1478 = vld [vmem:[%s839 + $0x8] sm:$0xff]
    %v1479 = vld [vmem:[%s839 + $0x10] sm:$0xff]
    %v1480 = vld [vmem:[%s839 + $0x18] sm:$0xff]
    %v1481 = vld [vmem:[%s839 + $0x20] sm:$0xff]
    %v1482 = vld [vmem:[%s839 + $0x28] sm:$0xff]
    %v1483 = vld [vmem:[%s839 + $0x30] sm:$0xff]
    %v1484 = vld [vmem:[%s839 + $0x38] sm:$0xff]
    %v1485 = vld [vmem:[%s839 + $0x40] sm:$0xff]
    %v1486 = vld [vmem:[%s839 + $0x48] sm:$0xff]
    %v1487 = vld [vmem:[%s839 + $0x50] sm:$0xff]
    %v1488 = vld [vmem:[%s839 + $0x58] sm:$0xff]
    %v1489 = vld [vmem:[%s839 + $0x60] sm:$0xff]
    %v1490 = vld [vmem:[%s839 + $0x68] sm:$0xff]
    %v1491 = vld [vmem:[%s839 + $0x70] sm:$0xff]
    %v1492 = vld [vmem:[%s839 + $0x78] sm:$0xff]
    %v1493 = vld [vmem:[%s839 + $0x80] sm:$0xff]
    %v1494 = vld [vmem:[%s839 + $0x88] sm:$0xff]
    %v1495 = vld [vmem:[%s839 + $0x90] sm:$0xff]
    %v1496 = vld [vmem:[%s839 + $0x98] sm:$0x3]
    %v1499 = vrot.slane %v1455, 1
    %v1500 = vrot.slane %v1456, 1
    %v1502 = vsel %vm865, %v1500, 0
    %v1505 = vsel %vm60, %v1496, 0
    %1507 = vmatprep.subr.mxu0 0.0
    %1508 = vmatpush1.msra.mxu0 %v1477
    %1509 = vmatprep.subr.mxu0 0.0
    %1510 = vmatpush1.msra.mxu0 %v1478
    %1511 = vmatprep.subr.mxu0 0.0
    %1512 = vmatpush1.msra.mxu0 %v1479
    %1513 = vmatprep.subr.mxu0 0.0
    %1514 = vmatpush1.msra.mxu0 %v1480
    %1515 = vmatprep.subr.mxu0 0.0
    %1516 = vmatpush1.msra.mxu0 %v1481
    %1517 = vmatprep.subr.mxu0 0.0
    %1518 = vmatpush1.msra.mxu0 %v1482
    %1519 = vmatprep.subr.mxu0 0.0
    %1520 = vmatpush1.msra.mxu0 %v1483
    %1521 = vmatprep.subr.mxu0 0.0
    %1522 = vmatpush1.msra.mxu0 %v1484
    %1523 = vmatprep.subr.mxu0 0.0
    %1524 = vmatpush1.msra.mxu0 %v1485
    %1525 = vmatprep.subr.mxu0 0.0
    %1526 = vmatpush1.msra.mxu0 %v1486
    %1527 = vmatprep.subr.mxu0 0.0
    %1528 = vmatpush1.msra.mxu0 %v1487
    %1529 = vmatprep.subr.mxu0 0.0
    %1530 = vmatpush1.msra.mxu0 %v1488
    %1531 = vmatprep.subr.mxu0 0.0
    %1532 = vmatpush1.msra.mxu0 %v1489
    %1533 = vmatprep.subr.mxu0 0.0
    %1534 = vmatpush1.msra.mxu0 %v1490
    %1535 = vmatprep.subr.mxu0 0.0
    %1536 = vmatpush1.msra.mxu0 %v1491
    %1537 = vmatprep.subr.mxu0 0.0
    %1538 = vmatpush1.msra.mxu0 %v1492
    %1539 = vmatprep.subr.mxu0 0.0
    %1540 = vmatpush1.msra.mxu0 %v1493
    %1541 = vmatprep.subr.mxu0 0.0
    %1542 = vmatpush1.msra.mxu0 %v1494
    %1543 = vmatprep.subr.mxu0 0.0
    %1544 = vmatpush1.msra.mxu0 %v1495
    %1545 = vmatprep.subr.mxu0 0.0
    %1546 = vmatpush1.msra.mxu0 %v1505
    %1547 = vmatprep.subr.mxu0 0.0
    %1548 = vmatpush1.msra.mxu0 0.0
    %1549 = vmatprep.subr.mxu0 0.0
    %1550 = vmatpush1.msra.mxu0 0.0
    %1551 = vmatprep.subr.mxu0 0.0
    %1552 = vmatpush1.msra.mxu0 0.0
    %1553 = vmatprep.subr.mxu0 0.0
    %1554 = vmatpush1.msra.mxu0 0.0
    %1555 = vmatprep.subr.mxu0 0.0
    %1556 = vmatpush1.msra.mxu0 0.0
    %1557 = vmatprep.subr.mxu0 0.0
    %1558 = vmatpush1.msra.mxu0 0.0
    %1559 = vmatprep.subr.mxu0 0.0
    %1560 = vmatpush1.msra.mxu0 0.0
    %1561 = vmatprep.subr.mxu0 0.0
    %1562 = vmatpush1.msra.mxu0 0.0
    %1563 = vmatprep.subr.mxu0 0.0
    %1564 = vmatpush1.msra.mxu0 0.0
    %1565 = vmatprep.subr.mxu0 0.0
    %1566 = vmatpush1.msra.mxu0 0.0
    %1567 = vmatprep.subr.mxu0 0.0
    %1568 = vmatpush1.msra.mxu0 0.0
    %1569 = vmatprep.subr.mxu0 0.0
    %1570 = vmatpush1.msra.mxu0 0.0
    %1571 = vmatprep.mubr.f32.mxu0 %v1502
    %1572 = vmatmul.mubr.f32.gmra.mrb[0].mxu0 %v1499
    %v1573 = vpop.f32.mrb[0].mxu0
    %v1574 = vadd.f32 0.0, %v1573
    %v1575 = vpop.f32.mrb[0].mxu0
    %1576 = vdwg.mxu0
    %v1577 = vsel %vm865, %v1456, 0
    %v1580 = vsel %vm60, %v1476, 0
    %1582 = vmatprep.subr.mxu0 0.0
    %1583 = vmatpush1.msra.mxu0 %v1457
    %1584 = vmatprep.subr.mxu0 0.0
    %1585 = vmatpush1.msra.mxu0 %v1458
    %1586 = vmatprep.subr.mxu0 0.0
    %1587 = vmatpush1.msra.mxu0 %v1459
    %1588 = vmatprep.subr.mxu0 0.0
    %1589 = vmatpush1.msra.mxu0 %v1460
    %1590 = vmatprep.subr.mxu0 0.0
    %1591 = vmatpush1.msra.mxu0 %v1461
    %1592 = vmatprep.subr.mxu0 0.0
    %1593 = vmatpush1.msra.mxu0 %v1462
    %1594 = vmatprep.subr.mxu0 0.0
    %1595 = vmatpush1.msra.mxu0 %v1463
    %1596 = vmatprep.subr.mxu0 0.0
    %1597 = vmatpush1.msra.mxu0 %v1464
    %1598 = vmatprep.subr.mxu0 0.0
    %1599 = vmatpush1.msra.mxu0 %v1465
    %1600 = vmatprep.subr.mxu0 0.0
    %1601 = vmatpush1.msra.mxu0 %v1466
    %1602 = vmatprep.subr.mxu0 0.0
    %1603 = vmatpush1.msra.mxu0 %v1467
    %1604 = vmatprep.subr.mxu0 0.0
    %1605 = vmatpush1.msra.mxu0 %v1468
    %1606 = vmatprep.subr.mxu0 0.0
    %1607 = vmatpush1.msra.mxu0 %v1469
    %1608 = vmatprep.subr.mxu0 0.0
    %1609 = vmatpush1.msra.mxu0 %v1470
    %1610 = vmatprep.subr.mxu0 0.0
    %1611 = vmatpush1.msra.mxu0 %v1471
    %1612 = vmatprep.subr.mxu0 0.0
    %1613 = vmatpush1.msra.mxu0 %v1472
    %1614 = vmatprep.subr.mxu0 0.0
    %1615 = vmatpush1.msra.mxu0 %v1473
    %1616 = vmatprep.subr.mxu0 0.0
    %1617 = vmatpush1.msra.mxu0 %v1474
    %1618 = vmatprep.subr.mxu0 0.0
    %1619 = vmatpush1.msra.mxu0 %v1475
    %1620 = vmatprep.subr.mxu0 0.0
    %1621 = vmatpush1.msra.mxu0 %v1580
    %1622 = vmatprep.subr.mxu0 0.0
    %1623 = vmatpush1.msra.mxu0 0.0
    %1624 = vmatprep.subr.mxu0 0.0
    %1625 = vmatpush1.msra.mxu0 0.0
    %1626 = vmatprep.subr.mxu0 0.0
    %1627 = vmatpush1.msra.mxu0 0.0
    %1628 = vmatprep.subr.mxu0 0.0
    %1629 = vmatpush1.msra.mxu0 0.0
    %1630 = vmatprep.subr.mxu0 0.0
    %1631 = vmatpush1.msra.mxu0 0.0
    %1632 = vmatprep.subr.mxu0 0.0
    %1633 = vmatpush1.msra.mxu0 0.0
    %1634 = vmatprep.subr.mxu0 0.0
    %1635 = vmatpush1.msra.mxu0 0.0
    %1636 = vmatprep.subr.mxu0 0.0
    %1637 = vmatpush1.msra.mxu0 0.0
    %1638 = vmatprep.subr.mxu0 0.0
    %1639 = vmatpush1.msra.mxu0 0.0
    %1640 = vmatprep.subr.mxu0 0.0
    %1641 = vmatpush1.msra.mxu0 0.0
    %1642 = vmatprep.subr.mxu0 0.0
    %1643 = vmatpush1.msra.mxu0 0.0
    %1644 = vmatprep.subr.mxu0 0.0
    %1645 = vmatpush1.msra.mxu0 0.0
    %1646 = vmatprep.mubr.f32.mxu0 %v1577
    %1647 = vmatmul.mubr.f32.gmra.mrb[0].mxu0 %v1455
    %v1648 = vpop.f32.mrb[0].mxu0
    %v1649 = vadd.f32 %v1574, %v1648
    %v1650 = vpop.f32.mrb[0].mxu0
    %1651 = vdwg.mxu0
    %v1652 = vld [vmem:[%s1016] sm:$0xff]
    %v1653 = vld [vmem:[%s1016 + $0x8] sm:$0xff]
    %v1654 = vld [vmem:[%s1016 + $0x10] sm:$0xff]
    %v1655 = vld [vmem:[%s1016 + $0x18] sm:$0xff]
    %v1656 = vld [vmem:[%s1016 + $0x20] sm:$0xff]
    %v1657 = vld [vmem:[%s1016 + $0x28] sm:$0xff]
    %v1658 = vld [vmem:[%s1016 + $0x30] sm:$0xff]
    %v1659 = vld [vmem:[%s1016 + $0x38] sm:$0xff]
    %v1660 = vld [vmem:[%s1016 + $0x40] sm:$0xff]
    %v1661 = vld [vmem:[%s1016 + $0x48] sm:$0xff]
    %v1662 = vld [vmem:[%s1016 + $0x50] sm:$0xff]
    %v1663 = vld [vmem:[%s1016 + $0x58] sm:$0xff]
    %v1664 = vld [vmem:[%s1016 + $0x60] sm:$0xff]
    %v1665 = vld [vmem:[%s1016 + $0x68] sm:$0xff]
    %v1666 = vld [vmem:[%s1016 + $0x70] sm:$0xff]
    %v1667 = vld [vmem:[%s1016 + $0x78] sm:$0xff]
    %v1668 = vld [vmem:[%s1016 + $0x80] sm:$0xff]
    %v1669 = vld [vmem:[%s1016 + $0x88] sm:$0xff]
    %v1670 = vld [vmem:[%s1016 + $0x90] sm:$0xff]
    %v1671 = vld [vmem:[%s1016 + $0x98] sm:$0x3]
    %v1672 = vrot.slane %v1455, 2
    %v1673 = vrot.slane %v1456, 2
    %v1675 = vsel %vm865, %v1673, 0
    %v1678 = vsel %vm60, %v1671, 0
    %1680 = vmatprep.subr.mxu0 0.0
    %1681 = vmatpush1.msra.mxu0 %v1652
    %1682 = vmatprep.subr.mxu0 0.0
    %1683 = vmatpush1.msra.mxu0 %v1653
    %1684 = vmatprep.subr.mxu0 0.0
    %1685 = vmatpush1.msra.mxu0 %v1654
    %1686 = vmatprep.subr.mxu0 0.0
    %1687 = vmatpush1.msra.mxu0 %v1655
    %1688 = vmatprep.subr.mxu0 0.0
    %1689 = vmatpush1.msra.mxu0 %v1656
    %1690 = vmatprep.subr.mxu0 0.0
    %1691 = vmatpush1.msra.mxu0 %v1657
    %1692 = vmatprep.subr.mxu0 0.0
    %1693 = vmatpush1.msra.mxu0 %v1658
    %1694 = vmatprep.subr.mxu0 0.0
    %1695 = vmatpush1.msra.mxu0 %v1659
    %1696 = vmatprep.subr.mxu0 0.0
    %1697 = vmatpush1.msra.mxu0 %v1660
    %1698 = vmatprep.subr.mxu0 0.0
    %1699 = vmatpush1.msra.mxu0 %v1661
    %1700 = vmatprep.subr.mxu0 0.0
    %1701 = vmatpush1.msra.mxu0 %v1662
    %1702 = vmatprep.subr.mxu0 0.0
    %1703 = vmatpush1.msra.mxu0 %v1663
    %1704 = vmatprep.subr.mxu0 0.0
    %1705 = vmatpush1.msra.mxu0 %v1664
    %1706 = vmatprep.subr.mxu0 0.0
    %1707 = vmatpush1.msra.mxu0 %v1665
    %1708 = vmatprep.subr.mxu0 0.0
    %1709 = vmatpush1.msra.mxu0 %v1666
    %1710 = vmatprep.subr.mxu0 0.0
    %1711 = vmatpush1.msra.mxu0 %v1667
    %1712 = vmatprep.subr.mxu0 0.0
    %1713 = vmatpush1.msra.mxu0 %v1668
    %1714 = vmatprep.subr.mxu0 0.0
    %1715 = vmatpush1.msra.mxu0 %v1669
    %1716 = vmatprep.subr.mxu0 0.0
    %1717 = vmatpush1.msra.mxu0 %v1670
    %1718 = vmatprep.subr.mxu0 0.0
    %1719 = vmatpush1.msra.mxu0 %v1678
    %1720 = vmatprep.subr.mxu0 0.0
    %1721 = vmatpush1.msra.mxu0 0.0
    %1722 = vmatprep.subr.mxu0 0.0
    %1723 = vmatpush1.msra.mxu0 0.0
    %1724 = vmatprep.subr.mxu0 0.0
    %1725 = vmatpush1.msra.mxu0 0.0
    %1726 = vmatprep.subr.mxu0 0.0
    %1727 = vmatpush1.msra.mxu0 0.0
    %1728 = vmatprep.subr.mxu0 0.0
    %1729 = vmatpush1.msra.mxu0 0.0
    %1730 = vmatprep.subr.mxu0 0.0
    %1731 = vmatpush1.msra.mxu0 0.0
    %1732 = vmatprep.subr.mxu0 0.0
    %1733 = vmatpush1.msra.mxu0 0.0
    %1734 = vmatprep.subr.mxu0 0.0
    %1735 = vmatpush1.msra.mxu0 0.0
    %1736 = vmatprep.subr.mxu0 0.0
    %1737 = vmatpush1.msra.mxu0 0.0
    %1738 = vmatprep.subr.mxu0 0.0
    %1739 = vmatpush1.msra.mxu0 0.0
    %1740 = vmatprep.subr.mxu0 0.0
    %1741 = vmatpush1.msra.mxu0 0.0
    %1742 = vmatprep.subr.mxu0 0.0
    %1743 = vmatpush1.msra.mxu0 0.0
    %1744 = vmatprep.mubr.f32.mxu0 %v1675
    %1745 = vmatmul.mubr.f32.gmra.mrb[0].mxu0 %v1672
    %v1746 = vpop.f32.mrb[0].mxu0
    %v1747 = vadd.f32 0.0, %v1746
    %v1748 = vpop.f32.mrb[0].mxu0
    %1749 = vdwg.mxu0
    %v1750 = vadd.f32 %v1649, %v1747
    %v1751 = vld [vmem:[%s1116] sm:$0xff]
    %v1752 = vld [vmem:[%s1116 + $0x8] sm:$0xff]
    %v1753 = vld [vmem:[%s1116 + $0x10] sm:$0xff]
    %v1754 = vld [vmem:[%s1116 + $0x18] sm:$0xff]
    %v1755 = vld [vmem:[%s1116 + $0x20] sm:$0xff]
    %v1756 = vld [vmem:[%s1116 + $0x28] sm:$0xff]
    %v1757 = vld [vmem:[%s1116 + $0x30] sm:$0xff]
    %v1758 = vld [vmem:[%s1116 + $0x38] sm:$0xff]
    %v1759 = vld [vmem:[%s1116 + $0x40] sm:$0xff]
    %v1760 = vld [vmem:[%s1116 + $0x48] sm:$0xff]
    %v1761 = vld [vmem:[%s1116 + $0x50] sm:$0xff]
    %v1762 = vld [vmem:[%s1116 + $0x58] sm:$0xff]
    %v1763 = vld [vmem:[%s1116 + $0x60] sm:$0xff]
    %v1764 = vld [vmem:[%s1116 + $0x68] sm:$0xff]
    %v1765 = vld [vmem:[%s1116 + $0x70] sm:$0xff]
    %v1766 = vld [vmem:[%s1116 + $0x78] sm:$0xff]
    %v1767 = vld [vmem:[%s1116 + $0x80] sm:$0xff]
    %v1768 = vld [vmem:[%s1116 + $0x88] sm:$0xff]
    %v1769 = vld [vmem:[%s1116 + $0x90] sm:$0xff]
    %v1770 = vld [vmem:[%s1116 + $0x98] sm:$0x3]
    %v1771 = vrot.slane %v1455, 3
    %v1772 = vrot.slane %v1456, 3
    %v1774 = vsel %vm865, %v1772, 0
    %v1777 = vsel %vm60, %v1770, 0
    %1779 = vmatprep.subr.mxu0 0.0
    %1780 = vmatpush1.msra.mxu0 %v1751
    %1781 = vmatprep.subr.mxu0 0.0
    %1782 = vmatpush1.msra.mxu0 %v1752
    %1783 = vmatprep.subr.mxu0 0.0
    %1784 = vmatpush1.msra.mxu0 %v1753
    %1785 = vmatprep.subr.mxu0 0.0
    %1786 = vmatpush1.msra.mxu0 %v1754
    %1787 = vmatprep.subr.mxu0 0.0
    %1788 = vmatpush1.msra.mxu0 %v1755
    %1789 = vmatprep.subr.mxu0 0.0
    %1790 = vmatpush1.msra.mxu0 %v1756
    %1791 = vmatprep.subr.mxu0 0.0
    %1792 = vmatpush1.msra.mxu0 %v1757
    %1793 = vmatprep.subr.mxu0 0.0
    %1794 = vmatpush1.msra.mxu0 %v1758
    %1795 = vmatprep.subr.mxu0 0.0
    %1796 = vmatpush1.msra.mxu0 %v1759
    %1797 = vmatprep.subr.mxu0 0.0
    %1798 = vmatpush1.msra.mxu0 %v1760
    %1799 = vmatprep.subr.mxu0 0.0
    %1800 = vmatpush1.msra.mxu0 %v1761
    %1801 = vmatprep.subr.mxu0 0.0
    %1802 = vmatpush1.msra.mxu0 %v1762
    %1803 = vmatprep.subr.mxu0 0.0
    %1804 = vmatpush1.msra.mxu0 %v1763
    %1805 = vmatprep.subr.mxu0 0.0
    %1806 = vmatpush1.msra.mxu0 %v1764
    %1807 = vmatprep.subr.mxu0 0.0
    %1808 = vmatpush1.msra.mxu0 %v1765
    %1809 = vmatprep.subr.mxu0 0.0
    %1810 = vmatpush1.msra.mxu0 %v1766
    %1811 = vmatprep.subr.mxu0 0.0
    %1812 = vmatpush1.msra.mxu0 %v1767
    %1813 = vmatprep.subr.mxu0 0.0
    %1814 = vmatpush1.msra.mxu0 %v1768
    %1815 = vmatprep.subr.mxu0 0.0
    %1816 = vmatpush1.msra.mxu0 %v1769
    %1817 = vmatprep.subr.mxu0 0.0
    %1818 = vmatpush1.msra.mxu0 %v1777
    %1819 = vmatprep.subr.mxu0 0.0
    %1820 = vmatpush1.msra.mxu0 0.0
    %1821 = vmatprep.subr.mxu0 0.0
    %1822 = vmatpush1.msra.mxu0 0.0
    %1823 = vmatprep.subr.mxu0 0.0
    %1824 = vmatpush1.msra.mxu0 0.0
    %1825 = vmatprep.subr.mxu0 0.0
    %1826 = vmatpush1.msra.mxu0 0.0
    %1827 = vmatprep.subr.mxu0 0.0
    %1828 = vmatpush1.msra.mxu0 0.0
    %1829 = vmatprep.subr.mxu0 0.0
    %1830 = vmatpush1.msra.mxu0 0.0
    %1831 = vmatprep.subr.mxu0 0.0
    %1832 = vmatpush1.msra.mxu0 0.0
    %1833 = vmatprep.subr.mxu0 0.0
    %1834 = vmatpush1.msra.mxu0 0.0
    %1835 = vmatprep.subr.mxu0 0.0
    %1836 = vmatpush1.msra.mxu0 0.0
    %1837 = vmatprep.subr.mxu0 0.0
    %1838 = vmatpush1.msra.mxu0 0.0
    %1839 = vmatprep.subr.mxu0 0.0
    %1840 = vmatpush1.msra.mxu0 0.0
    %1841 = vmatprep.subr.mxu0 0.0
    %1842 = vmatpush1.msra.mxu0 0.0
    %1843 = vmatprep.mubr.f32.mxu0 %v1774
    %1844 = vmatmul.mubr.f32.gmra.mrb[0].mxu0 %v1771
    %v1845 = vpop.f32.mrb[0].mxu0
    %v1846 = vadd.f32 0.0, %v1845
    %v1847 = vpop.f32.mrb[0].mxu0
    %1848 = vdwg.mxu0
    %v1849 = vadd.f32 %v1750, %v1846
    %v1850 = vld [vmem:[%s1216] sm:$0xff]
    %v1851 = vld [vmem:[%s1216 + $0x8] sm:$0xff]
    %v1852 = vld [vmem:[%s1216 + $0x10] sm:$0xff]
    %v1853 = vld [vmem:[%s1216 + $0x18] sm:$0xff]
    %v1854 = vld [vmem:[%s1216 + $0x20] sm:$0xff]
    %v1855 = vld [vmem:[%s1216 + $0x28] sm:$0xff]
    %v1856 = vld [vmem:[%s1216 + $0x30] sm:$0xff]
    %v1857 = vld [vmem:[%s1216 + $0x38] sm:$0xff]
    %v1858 = vld [vmem:[%s1216 + $0x40] sm:$0xff]
    %v1859 = vld [vmem:[%s1216 + $0x48] sm:$0xff]
    %v1860 = vld [vmem:[%s1216 + $0x50] sm:$0xff]
    %v1861 = vld [vmem:[%s1216 + $0x58] sm:$0xff]
    %v1862 = vld [vmem:[%s1216 + $0x60] sm:$0xff]
    %v1863 = vld [vmem:[%s1216 + $0x68] sm:$0xff]
    %v1864 = vld [vmem:[%s1216 + $0x70] sm:$0xff]
    %v1865 = vld [vmem:[%s1216 + $0x78] sm:$0xff]
    %v1866 = vld [vmem:[%s1216 + $0x80] sm:$0xff]
    %v1867 = vld [vmem:[%s1216 + $0x88] sm:$0xff]
    %v1868 = vld [vmem:[%s1216 + $0x90] sm:$0xff]
    %v1869 = vld [vmem:[%s1216 + $0x98] sm:$0x3]
    %v1870 = vrot.slane %v1455, 4
    %v1871 = vrot.slane %v1456, 4
    %v1873 = vsel %vm865, %v1871, 0
    %v1876 = vsel %vm60, %v1869, 0
    %1878 = vmatprep.subr.mxu0 0.0
    %1879 = vmatpush1.msra.mxu0 %v1850
    %1880 = vmatprep.subr.mxu0 0.0
    %1881 = vmatpush1.msra.mxu0 %v1851
    %1882 = vmatprep.subr.mxu0 0.0
    %1883 = vmatpush1.msra.mxu0 %v1852
    %1884 = vmatprep.subr.mxu0 0.0
    %1885 = vmatpush1.msra.mxu0 %v1853
    %1886 = vmatprep.subr.mxu0 0.0
    %1887 = vmatpush1.msra.mxu0 %v1854
    %1888 = vmatprep.subr.mxu0 0.0
    %1889 = vmatpush1.msra.mxu0 %v1855
    %1890 = vmatprep.subr.mxu0 0.0
    %1891 = vmatpush1.msra.mxu0 %v1856
    %1892 = vmatprep.subr.mxu0 0.0
    %1893 = vmatpush1.msra.mxu0 %v1857
    %1894 = vmatprep.subr.mxu0 0.0
    %1895 = vmatpush1.msra.mxu0 %v1858
    %1896 = vmatprep.subr.mxu0 0.0
    %1897 = vmatpush1.msra.mxu0 %v1859
    %1898 = vmatprep.subr.mxu0 0.0
    %1899 = vmatpush1.msra.mxu0 %v1860
    %1900 = vmatprep.subr.mxu0 0.0
    %1901 = vmatpush1.msra.mxu0 %v1861
    %1902 = vmatprep.subr.mxu0 0.0
    %1903 = vmatpush1.msra.mxu0 %v1862
    %1904 = vmatprep.subr.mxu0 0.0
    %1905 = vmatpush1.msra.mxu0 %v1863
    %1906 = vmatprep.subr.mxu0 0.0
    %1907 = vmatpush1.msra.mxu0 %v1864
    %1908 = vmatprep.subr.mxu0 0.0
    %1909 = vmatpush1.msra.mxu0 %v1865
    %1910 = vmatprep.subr.mxu0 0.0
    %1911 = vmatpush1.msra.mxu0 %v1866
    %1912 = vmatprep.subr.mxu0 0.0
    %1913 = vmatpush1.msra.mxu0 %v1867
    %1914 = vmatprep.subr.mxu0 0.0
    %1915 = vmatpush1.msra.mxu0 %v1868
    %1916 = vmatprep.subr.mxu0 0.0
    %1917 = vmatpush1.msra.mxu0 %v1876
    %1918 = vmatprep.subr.mxu0 0.0
    %1919 = vmatpush1.msra.mxu0 0.0
    %1920 = vmatprep.subr.mxu0 0.0
    %1921 = vmatpush1.msra.mxu0 0.0
    %1922 = vmatprep.subr.mxu0 0.0
    %1923 = vmatpush1.msra.mxu0 0.0
    %1924 = vmatprep.subr.mxu0 0.0
    %1925 = vmatpush1.msra.mxu0 0.0
    %1926 = vmatprep.subr.mxu0 0.0
    %1927 = vmatpush1.msra.mxu0 0.0
    %1928 = vmatprep.subr.mxu0 0.0
    %1929 = vmatpush1.msra.mxu0 0.0
    %1930 = vmatprep.subr.mxu0 0.0
    %1931 = vmatpush1.msra.mxu0 0.0
    %1932 = vmatprep.subr.mxu0 0.0
    %1933 = vmatpush1.msra.mxu0 0.0
    %1934 = vmatprep.subr.mxu0 0.0
    %1935 = vmatpush1.msra.mxu0 0.0
    %1936 = vmatprep.subr.mxu0 0.0
    %1937 = vmatpush1.msra.mxu0 0.0
    %1938 = vmatprep.subr.mxu0 0.0
    %1939 = vmatpush1.msra.mxu0 0.0
    %1940 = vmatprep.subr.mxu0 0.0
    %1941 = vmatpush1.msra.mxu0 0.0
    %1942 = vmatprep.mubr.f32.mxu0 %v1873
    %1943 = vmatmul.mubr.f32.gmra.mrb[0].mxu0 %v1870
    %v1944 = vpop.f32.mrb[0].mxu0
    %v1945 = vadd.f32 0.0, %v1944
    %v1946 = vpop.f32.mrb[0].mxu0
    %1947 = vdwg.mxu0
    %v1948 = vadd.f32 %v1849, %v1945
    %v1949 = vld [vmem:[%s1316] sm:$0xff]
    %v1950 = vld [vmem:[%s1316 + $0x8] sm:$0xff]
    %v1951 = vld [vmem:[%s1316 + $0x10] sm:$0xff]
    %v1952 = vld [vmem:[%s1316 + $0x18] sm:$0xff]
    %v1953 = vld [vmem:[%s1316 + $0x20] sm:$0xff]
    %v1954 = vld [vmem:[%s1316 + $0x28] sm:$0xff]
    %v1955 = vld [vmem:[%s1316 + $0x30] sm:$0xff]
    %v1956 = vld [vmem:[%s1316 + $0x38] sm:$0xff]
    %v1957 = vld [vmem:[%s1316 + $0x40] sm:$0xff]
    %v1958 = vld [vmem:[%s1316 + $0x48] sm:$0xff]
    %v1959 = vld [vmem:[%s1316 + $0x50] sm:$0xff]
    %v1960 = vld [vmem:[%s1316 + $0x58] sm:$0xff]
    %v1961 = vld [vmem:[%s1316 + $0x60] sm:$0xff]
    %v1962 = vld [vmem:[%s1316 + $0x68] sm:$0xff]
    %v1963 = vld [vmem:[%s1316 + $0x70] sm:$0xff]
    %v1964 = vld [vmem:[%s1316 + $0x78] sm:$0xff]
    %v1965 = vld [vmem:[%s1316 + $0x80] sm:$0xff]
    %v1966 = vld [vmem:[%s1316 + $0x88] sm:$0xff]
    %v1967 = vld [vmem:[%s1316 + $0x90] sm:$0xff]
    %v1968 = vld [vmem:[%s1316 + $0x98] sm:$0x3]
    %v1969 = vrot.slane %v1455, 5
    %v1970 = vrot.slane %v1456, 5
    %v1972 = vsel %vm865, %v1970, 0
    %v1975 = vsel %vm60, %v1968, 0
    %1977 = vmatprep.subr.mxu0 0.0
    %1978 = vmatpush1.msra.mxu0 %v1949
    %1979 = vmatprep.subr.mxu0 0.0
    %1980 = vmatpush1.msra.mxu0 %v1950
    %1981 = vmatprep.subr.mxu0 0.0
    %1982 = vmatpush1.msra.mxu0 %v1951
    %1983 = vmatprep.subr.mxu0 0.0
    %1984 = vmatpush1.msra.mxu0 %v1952
    %1985 = vmatprep.subr.mxu0 0.0
    %1986 = vmatpush1.msra.mxu0 %v1953
    %1987 = vmatprep.subr.mxu0 0.0
    %1988 = vmatpush1.msra.mxu0 %v1954
    %1989 = vmatprep.subr.mxu0 0.0
    %1990 = vmatpush1.msra.mxu0 %v1955
    %1991 = vmatprep.subr.mxu0 0.0
    %1992 = vmatpush1.msra.mxu0 %v1956
    %1993 = vmatprep.subr.mxu0 0.0
    %1994 = vmatpush1.msra.mxu0 %v1957
    %1995 = vmatprep.subr.mxu0 0.0
    %1996 = vmatpush1.msra.mxu0 %v1958
    %1997 = vmatprep.subr.mxu0 0.0
    %1998 = vmatpush1.msra.mxu0 %v1959
    %1999 = vmatprep.subr.mxu0 0.0
    %2000 = vmatpush1.msra.mxu0 %v1960
    %2001 = vmatprep.subr.mxu0 0.0
    %2002 = vmatpush1.msra.mxu0 %v1961
    %2003 = vmatprep.subr.mxu0 0.0
    %2004 = vmatpush1.msra.mxu0 %v1962
    %2005 = vmatprep.subr.mxu0 0.0
    %2006 = vmatpush1.msra.mxu0 %v1963
    %2007 = vmatprep.subr.mxu0 0.0
    %2008 = vmatpush1.msra.mxu0 %v1964
    %2009 = vmatprep.subr.mxu0 0.0
    %2010 = vmatpush1.msra.mxu0 %v1965
    %2011 = vmatprep.subr.mxu0 0.0
    %2012 = vmatpush1.msra.mxu0 %v1966
    %2013 = vmatprep.subr.mxu0 0.0
    %2014 = vmatpush1.msra.mxu0 %v1967
    %2015 = vmatprep.subr.mxu0 0.0
    %2016 = vmatpush1.msra.mxu0 %v1975
    %2017 = vmatprep.subr.mxu0 0.0
    %2018 = vmatpush1.msra.mxu0 0.0
    %2019 = vmatprep.subr.mxu0 0.0
    %2020 = vmatpush1.msra.mxu0 0.0
    %2021 = vmatprep.subr.mxu0 0.0
    %2022 = vmatpush1.msra.mxu0 0.0
    %2023 = vmatprep.subr.mxu0 0.0
    %2024 = vmatpush1.msra.mxu0 0.0
    %2025 = vmatprep.subr.mxu0 0.0
    %2026 = vmatpush1.msra.mxu0 0.0
    %2027 = vmatprep.subr.mxu0 0.0
    %2028 = vmatpush1.msra.mxu0 0.0
    %2029 = vmatprep.subr.mxu0 0.0
    %2030 = vmatpush1.msra.mxu0 0.0
    %2031 = vmatprep.subr.mxu0 0.0
    %2032 = vmatpush1.msra.mxu0 0.0
    %2033 = vmatprep.subr.mxu0 0.0
    %2034 = vmatpush1.msra.mxu0 0.0
    %2035 = vmatprep.subr.mxu0 0.0
    %2036 = vmatpush1.msra.mxu0 0.0
    %2037 = vmatprep.subr.mxu0 0.0
    %2038 = vmatpush1.msra.mxu0 0.0
    %2039 = vmatprep.subr.mxu0 0.0
    %2040 = vmatpush1.msra.mxu0 0.0
    %2041 = vmatprep.mubr.f32.mxu0 %v1972
    %2042 = vmatmul.mubr.f32.gmra.mrb[0].mxu0 %v1969
    %v2043 = vpop.f32.mrb[0].mxu0
    %v2044 = vadd.f32 0.0, %v2043
    %v2045 = vpop.f32.mrb[0].mxu0
    %2046 = vdwg.mxu0
    %v2047 = vadd.f32 %v1948, %v2044
    %v2048 = vld [vmem:[%s5] sm:$0x1]
    %v2049 = vadd.f32 %v2047, %v2048
    %v2050 = vmax.f32 %v2049, 0.0
    %v2051 = vxor.u32 %v2050, 2147483648
    %v2052 = vmul.f32 %v2051, 1.442695
    %v2053 = vpow.pop %v2052
    %v2054 = vadd.f32 %v2053, 1.0
    %v2055 = vrcp.pop %v2054
    %v2056 = vmul.f32 1.0, %v2055
    %2057 = vst.msk [vmem:[#allocation2 + $0x1] sm:$0x1] %vm1425, %v2056
    // Predicated region
    $region26: #{cnn_forward.1} parent=1 // pred_check
      _
    $region27: #{cnn_forward.1} parent=1 // pred_check_branch
      %2059 = sbr.rel (0) target = $region29
    $region28: #{cnn_forward.1} parent=1 // pred_region
      %s2061 = ssub.s32 32, 32
      %2062 = vsyncadd [#allocation3], %s2061
      %s2064 = sshll.u32 [#allocation2], 4
      %s2065 = int_to_ptr.vmem [resolvable:$true] %s2064
      %2067 = dma.vmem_to_hbm [thread:$0]  %s2065, 32, %s6, [#allocation3]
    $region29: #{cnn_forward.1} parent=1 // pred_fallthru
      _
    // Predicated region
    $region30: #{cnn_forward.1} parent=1 // pred_check
      _
    $region31: #{cnn_forward.1} parent=1 // pred_check_branch
      %2069 = sbr.rel (0) target = $region33
    $region32: #{cnn_forward.1} parent=1 // pred_region
      %2070 = dma.done [#allocation3], 32
    $region33: #{cnn_forward.1} parent=1 // pred_fallthru
      _
    %2071 = vsyncpa [#allocation3], 1

</llo_original>
